<compile_context>
chip_gen: v7x
topology: tpu7x:2x2x1
jax: 0.10.0
libtpu: 0.0.40
codegen_flags: <defaults>
</compile_context>

<pallas_src>
import functools

import jax
import jax.numpy as jnp
from jax.experimental import pallas as pl
from jax.experimental.pallas import tpu as pltpu


def _attention_kernel(x_ref, wqkv_ref, wout_ref, bout_ref, gamma_ref, beta_ref,
                      o_ref, *, bt, seq, heads, dim_head, eps, lane_dense_out):
    dim = x_ref.shape[-1]
    inner = heads * dim_head
    rows = bt * seq
    cdt = wqkv_ref.dtype          # matmul ("compute") dtype: f32 or bf16

    # ---- LayerNorm over the feature dim (f32 statistics; VPU/EUP path) ----
    x = x_ref[...].reshape(rows, dim).astype(jnp.float32)       # (rows, D)
    mean = jnp.mean(x, axis=-1, keepdims=True)
    xc = x - mean
    var = jnp.mean(xc * xc, axis=-1, keepdims=True)
    xn = xc * jax.lax.rsqrt(var + eps)
    xn = xn * gamma_ref[0].astype(jnp.float32) + beta_ref[0].astype(jnp.float32)

    # ---- fused qkv projection: ONE (rows, D) x (D, 3*inner) MXU matmul ----
    qkv = jnp.dot(xn.astype(cdt), wqkv_ref[...],
                  preferred_element_type=jnp.float32)            # (rows, 3*inner) f32

    # ---- rearrange 'b n (h d)' -> '(h b) n d' -----------------------------
    def to_heads(t):                      # (rows, inner) -> (heads*bt, seq, dh)
        parts = [t[b * seq:(b + 1) * seq, h * dim_head:(h + 1) * dim_head]
                 for h in range(heads) for b in range(bt)]       # g = h*bt + b
        return jnp.stack(parts, axis=0)

    scale = dim_head ** -0.5
    q = to_heads(qkv[:, :inner] * scale).astype(cdt)             # scale folded into q
    k = to_heads(qkv[:, inner:2 * inner]).astype(cdt)
    v = to_heads(qkv[:, 2 * inner:]).astype(cdt)

    # ---- attention, batched over every (head, batch) pair -----------------
    # Single contraction over dim_head: no per-head matmul loop, no k.T.
    s = jnp.einsum('gnd,gmd->gnm', q, k,
                   preferred_element_type=jnp.float32)           # (G, seq, seq) f32
    s = s - jnp.max(s, axis=-1, keepdims=True)
    e = jnp.exp(s)
    attn = e * pl.reciprocal(jnp.sum(e, axis=-1, keepdims=True), approx=True)
    o_g = jnp.einsum('gnm,gmd->gnd', attn.astype(cdt), v,
                     preferred_element_type=jnp.float32)         # (G, seq, dh) f32

    # ---- rearrange '(h b) n d' -> '(b n) (h d)' ----------------------------
    out = jnp.concatenate(
        [jnp.concatenate([o_g[h * bt + b] for h in range(heads)], axis=-1)
         for b in range(bt)], axis=0)                            # (rows, inner)

    # ---- output projection + bias ------------------------------------------
    y = jnp.dot(out.astype(cdt), wout_ref[...],
                preferred_element_type=jnp.float32)
    y = y + bout_ref[0].astype(jnp.float32)                      # (rows, D)

    if lane_dense_out:
        # Lane-dense store: write a (bt, seq*D) slab (last dim a multiple of
        # 128) so the writeback is unmasked `vst` instead of masked partials.
        y3 = y.reshape(bt, seq, dim)
        slab = jnp.concatenate([y3[:, i, :] for i in range(seq)], axis=-1)
        o_ref[...] = slab.astype(o_ref.dtype)
    else:
        o_ref[...] = y.reshape(bt, seq, dim).astype(o_ref.dtype)


def _pick_block_b(batch, seq, target_rows=256):
    """Largest divisor of `batch` whose row block (bt*seq) stays <= target."""
    if seq % 8 != 0:   # keep the in-kernel (bt, seq) row regrouping tile-aligned
        return 1
    bt = 1
    for cand in range(1, batch + 1):
        if batch % cand == 0 and cand * seq <= target_rows:
            bt = cand
    return bt


def attention_pallas(x, params, *, heads, dim_head, eps=1e-5,
                     compute_dtype=jnp.float32, block_b=None):
    B, N, D = x.shape
    inner = heads * dim_head
    wqkv, wout, bout, gamma, beta = params
    assert wqkv.shape == (D, 3 * inner) and wout.shape == (inner, D)

    bt = _pick_block_b(B, N) if block_b is None else block_b
    assert B % bt == 0, "block_b must divide the batch size"
    grid = (B // bt,)

    # Lane-dense output only when the (bt, N*D) slab satisfies the (8, 128)
    # block constraints; otherwise fall back to the natural (bt, N, D) block.
    lane_dense_out = (N * D) % 128 == 0 and (bt == B or bt % 8 == 0)

    # Resident weight tiles in the matmul dtype (bf16 halves their VMEM
    # footprint and doubles MXU throughput); LN params / bias stay f32.
    wqkv_c = wqkv.astype(compute_dtype)
    wout_c = wout.astype(compute_dtype)

    kernel = functools.partial(
        _attention_kernel, bt=bt, seq=N, heads=heads, dim_head=dim_head,
        eps=eps, lane_dense_out=lane_dense_out)

    if lane_dense_out:
        out_shape = jax.ShapeDtypeStruct((B, N * D), x.dtype)
        out_spec = pl.BlockSpec((bt, N * D), lambda b: (b, 0))
    else:
        out_shape = jax.ShapeDtypeStruct((B, N, D), x.dtype)
        out_spec = pl.BlockSpec((bt, N, D), lambda b: (b, 0, 0))

    y = pl.pallas_call(
        kernel,
        out_shape=out_shape,
        grid_spec=pltpu.PrefetchScalarGridSpec(
            num_scalar_prefetch=0,
            grid=grid,
            in_specs=[
                pl.BlockSpec((bt, N, D), lambda b: (b, 0, 0)),       # x block
                pl.BlockSpec((D, 3 * inner), lambda b: (0, 0)),      # Wqkv (resident)
                pl.BlockSpec((inner, D), lambda b: (0, 0)),          # Wout (resident)
                pl.BlockSpec((1, D), lambda b: (0, 0)),              # out bias
                pl.BlockSpec((1, D), lambda b: (0, 0)),              # LN gamma
                pl.BlockSpec((1, D), lambda b: (0, 0)),              # LN beta
            ],
            out_specs=out_spec,
        ),
        compiler_params=pltpu.CompilerParams(
            dimension_semantics=("parallel",)),
        # NOTE: default scoped VMEM (16/32 MiB) is ample for these block
        # sizes; set vmem_limit_bytes here if block_b / N / D grow.
    )(x, wqkv_c, wout_c, bout, gamma, beta)

    return y.reshape(B, N, D) if lane_dense_out else y


def attention_reference(x, params, *, heads, dim_head, eps=1e-5):
    """Pure-JAX reference matching the PyTorch forward pass."""
    wqkv, wout, bout, gamma, beta = params
    B, N, D = x.shape
    inner = heads * dim_head
    scale = dim_head ** -0.5

    mean = jnp.mean(x, axis=-1, keepdims=True)
    var = jnp.mean((x - mean) ** 2, axis=-1, keepdims=True)
    xn = (x - mean) / jnp.sqrt(var + eps) * gamma[0] + beta[0]

    qkv = xn @ wqkv                                           # (B, N, 3*inner)
    q, k, v = jnp.split(qkv, 3, axis=-1)

    def to_heads(t):  # 'b n (h d) -> b h n d'
        return t.reshape(B, N, heads, dim_head).transpose(0, 2, 1, 3)

    q, k, v = map(to_heads, (q, k, v))
    dots = jnp.einsum('bhnd,bhmd->bhnm', q, k) * scale
    attn = jax.nn.softmax(dots, axis=-1)
    out = jnp.einsum('bhnm,bhmd->bhnd', attn, v)
    out = out.transpose(0, 2, 1, 3).reshape(B, N, inner)      # 'b h n d -> b n (h d)'
    return out @ wout + bout[0]


if __name__ == "__main__":
    # Small shapes consistent with the module: dim=32, heads=4, dim_head=16.
    B, N, D = 2, 8, 32
    heads, dim_head = 4, 16
    inner = heads * dim_head

    key = jax.random.PRNGKey(0)
    kx, kqkv, kout, kb = jax.random.split(key, 4)

    x = jax.random.normal(kx, (B, N, D), dtype=jnp.float32)

    # Deterministic parameter init (shapes from __init__; no checkpoint load).
    wqkv = jax.random.normal(kqkv, (D, 3 * inner), dtype=jnp.float32) * 0.05
    wout = jax.random.normal(kout, (inner, D), dtype=jnp.float32) * 0.05
    bout = jax.random.normal(kb, (1, D), dtype=jnp.float32) * 0.01
    gamma = jnp.ones((1, D), dtype=jnp.float32)
    beta = jnp.zeros((1, D), dtype=jnp.float32)
    params = (wqkv, wout, bout, gamma, beta)

    y_ref = attention_reference(x, params, heads=heads, dim_head=dim_head)

    # Default f32 matmuls (tight check; approx reciprocal adds small slack).
    y = jax.block_until_ready(
        attention_pallas(x, params, heads=heads, dim_head=dim_head))
    assert y.shape == (B, N, D)
    assert jnp.allclose(y, y_ref, atol=5e-3, rtol=5e-3), "f32 kernel mismatch"

    # bf16 matmul inputs / bf16-resident weights (production config per the
    # perf review); f32 accumulation and f32 LN/softmax stats — looser check.
    y_bf16 = jax.block_until_ready(
        attention_pallas(x, params, heads=heads, dim_head=dim_head,
                         compute_dtype=jnp.bfloat16))
    assert jnp.allclose(y_bf16, y_ref, atol=3e-2, rtol=3e-2), "bf16 kernel mismatch"

    print("KERNEL_OK")
</pallas_src>

<mosaic_0001>
module attributes {stable_mosaic.version = 11 : i64} {
  func.func @_attention_kernel(%arg0: i32, %arg1: memref<2x8x32xf32, #tpu.memory_space<vmem>>, %arg2: memref<32x192xf32, #tpu.memory_space<vmem>>, %arg3: memref<64x32xf32, #tpu.memory_space<vmem>>, %arg4: memref<1x32xf32, #tpu.memory_space<vmem>>, %arg5: memref<1x32xf32, #tpu.memory_space<vmem>>, %arg6: memref<1x32xf32, #tpu.memory_space<vmem>>, %arg7: memref<2x256xf32, #tpu.memory_space<vmem>>) attributes {dimension_semantics = [#tpu.dimension_semantics<parallel>], iteration_bounds = array<i64: 1>, scalar_prefetch = 0 : i64, scratch_operands = 0 : i64, tpu.core_type = #tpu.core_type<tc>, window_params = [{transform_indices = @transform_0, window_bounds = array<i64: 2, 8, 32>}, {pipeline_mode = #tpu.pipeline_mode<synchronous>, transform_indices = @transform_1, window_bounds = array<i64: 32, 192>}, {pipeline_mode = #tpu.pipeline_mode<synchronous>, transform_indices = @transform_2, window_bounds = array<i64: 64, 32>}, {pipeline_mode = #tpu.pipeline_mode<synchronous>, transform_indices = @transform_3, window_bounds = array<i64: 1, 32>}, {pipeline_mode = #tpu.pipeline_mode<synchronous>, transform_indices = @transform_4, window_bounds = array<i64: 1, 32>}, {pipeline_mode = #tpu.pipeline_mode<synchronous>, transform_indices = @transform_5, window_bounds = array<i64: 1, 32>}, {transform_indices = @transform_6, window_bounds = array<i64: 2, 256>}]} {
    %c0 = arith.constant 0 : index
    %c0_0 = arith.constant 0 : index
    %c0_1 = arith.constant 0 : index
    %0 = vector.load %arg1[%c0, %c0_0, %c0_1] : memref<2x8x32xf32, #tpu.memory_space<vmem>>, vector<2x8x32xf32>
    %1 = vector.shape_cast %0 : vector<2x8x32xf32> to vector<16x32xf32>
    %cst = arith.constant dense<0.000000e+00> : vector<16xf32>
    %2 = vector.multi_reduction <add>, %1, %cst [1] : vector<16x32xf32> to vector<16xf32>
    %3 = vector.shape_cast %2 : vector<16xf32> to vector<16x1xf32>
    %cst_2 = arith.constant 3.200000e+01 : f32
    %4 = vector.broadcast %cst_2 : f32 to vector<16x1xf32>
    %5 = arith.divf %3, %4 : vector<16x1xf32>
    %6 = vector.broadcast %5 : vector<16x1xf32> to vector<16x32xf32>
    %7 = arith.subf %1, %6 : vector<16x32xf32>
    %8 = arith.mulf %7, %7 : vector<16x32xf32>
    %cst_3 = arith.constant dense<0.000000e+00> : vector<16xf32>
    %9 = vector.multi_reduction <add>, %8, %cst_3 [1] : vector<16x32xf32> to vector<16xf32>
    %10 = vector.shape_cast %9 : vector<16xf32> to vector<16x1xf32>
    %cst_4 = arith.constant 3.200000e+01 : f32
    %11 = vector.broadcast %cst_4 : f32 to vector<16x1xf32>
    %12 = arith.divf %10, %11 : vector<16x1xf32>
    %cst_5 = arith.constant 9.99999974E-6 : f32
    %13 = vector.broadcast %cst_5 : f32 to vector<16x1xf32>
    %14 = arith.addf %12, %13 : vector<16x1xf32>
    %15 = math.rsqrt %14 : vector<16x1xf32>
    %16 = vector.broadcast %15 : vector<16x1xf32> to vector<16x32xf32>
    %17 = arith.mulf %7, %16 : vector<16x32xf32>
    %c0_6 = arith.constant 0 : index
    %c0_7 = arith.constant 0 : index
    %18 = vector.load %arg5[%c0_6, %c0_7] : memref<1x32xf32, #tpu.memory_space<vmem>>, vector<1x32xf32>
    %19 = vector.shape_cast %18 : vector<1x32xf32> to vector<32xf32>
    %20 = vector.shape_cast %19 : vector<32xf32> to vector<1x32xf32>
    %21 = vector.broadcast %20 : vector<1x32xf32> to vector<16x32xf32>
    %22 = arith.mulf %17, %21 : vector<16x32xf32>
    %c0_8 = arith.constant 0 : index
    %c0_9 = arith.constant 0 : index
    %23 = vector.load %arg6[%c0_8, %c0_9] : memref<1x32xf32, #tpu.memory_space<vmem>>, vector<1x32xf32>
    %24 = vector.shape_cast %23 : vector<1x32xf32> to vector<32xf32>
    %25 = vector.shape_cast %24 : vector<32xf32> to vector<1x32xf32>
    %26 = vector.broadcast %25 : vector<1x32xf32> to vector<16x32xf32>
    %27 = arith.addf %22, %26 : vector<16x32xf32>
    %c0_10 = arith.constant 0 : index
    %c0_11 = arith.constant 0 : index
    %28 = vector.load %arg2[%c0_10, %c0_11] : memref<32x192xf32, #tpu.memory_space<vmem>>, vector<32x192xf32>
    %cst_12 = arith.constant dense<0.000000e+00> : vector<16x192xf32>
    %29 = tpu.matmul %27, %28, %cst_12 {dimension_numbers = #tpu.dot_dimension_numbers<[1], [0], [0], [1], [0, 0, 1, 1], [], []>} : vector<16x32xf32>, vector<32x192xf32>, vector<16x192xf32> -> vector<16x192xf32>
    %30 = vector.extract_strided_slice %29 {offsets = [0, 0], sizes = [16, 64], strides = [1, 1]} : vector<16x192xf32> to vector<16x64xf32>
    %cst_13 = arith.constant 2.500000e-01 : f32
    %31 = vector.broadcast %cst_13 : f32 to vector<16x64xf32>
    %32 = arith.mulf %30, %31 : vector<16x64xf32>
    %33 = vector.extract_strided_slice %32 {offsets = [0, 0], sizes = [8, 16], strides = [1, 1]} : vector<16x64xf32> to vector<8x16xf32>
    %34 = vector.extract_strided_slice %32 {offsets = [8, 0], sizes = [8, 16], strides = [1, 1]} : vector<16x64xf32> to vector<8x16xf32>
    %35 = vector.extract_strided_slice %32 {offsets = [0, 16], sizes = [8, 16], strides = [1, 1]} : vector<16x64xf32> to vector<8x16xf32>
    %36 = vector.extract_strided_slice %32 {offsets = [8, 16], sizes = [8, 16], strides = [1, 1]} : vector<16x64xf32> to vector<8x16xf32>
    %37 = vector.extract_strided_slice %32 {offsets = [0, 32], sizes = [8, 16], strides = [1, 1]} : vector<16x64xf32> to vector<8x16xf32>
    %38 = vector.extract_strided_slice %32 {offsets = [8, 32], sizes = [8, 16], strides = [1, 1]} : vector<16x64xf32> to vector<8x16xf32>
    %39 = vector.extract_strided_slice %32 {offsets = [0, 48], sizes = [8, 16], strides = [1, 1]} : vector<16x64xf32> to vector<8x16xf32>
    %40 = vector.extract_strided_slice %32 {offsets = [8, 48], sizes = [8, 16], strides = [1, 1]} : vector<16x64xf32> to vector<8x16xf32>
    %41 = vector.shape_cast %33 : vector<8x16xf32> to vector<1x8x16xf32>
    %42 = vector.shape_cast %34 : vector<8x16xf32> to vector<1x8x16xf32>
    %43 = vector.shape_cast %35 : vector<8x16xf32> to vector<1x8x16xf32>
    %44 = vector.shape_cast %36 : vector<8x16xf32> to vector<1x8x16xf32>
    %45 = vector.shape_cast %37 : vector<8x16xf32> to vector<1x8x16xf32>
    %46 = vector.shape_cast %38 : vector<8x16xf32> to vector<1x8x16xf32>
    %47 = vector.shape_cast %39 : vector<8x16xf32> to vector<1x8x16xf32>
    %48 = vector.shape_cast %40 : vector<8x16xf32> to vector<1x8x16xf32>
    %49 = tpu.concatenate %41, %42, %43, %44, %45, %46, %47, %48 in 0 : vector<1x8x16xf32>, vector<1x8x16xf32>, vector<1x8x16xf32>, vector<1x8x16xf32>, vector<1x8x16xf32>, vector<1x8x16xf32>, vector<1x8x16xf32>, vector<1x8x16xf32> -> vector<8x8x16xf32>
    %50 = vector.extract_strided_slice %29 {offsets = [0, 64], sizes = [16, 64], strides = [1, 1]} : vector<16x192xf32> to vector<16x64xf32>
    %51 = vector.extract_strided_slice %50 {offsets = [0, 0], sizes = [8, 16], strides = [1, 1]} : vector<16x64xf32> to vector<8x16xf32>
    %52 = vector.extract_strided_slice %50 {offsets = [8, 0], sizes = [8, 16], strides = [1, 1]} : vector<16x64xf32> to vector<8x16xf32>
    %53 = vector.extract_strided_slice %50 {offsets = [0, 16], sizes = [8, 16], strides = [1, 1]} : vector<16x64xf32> to vector<8x16xf32>
    %54 = vector.extract_strided_slice %50 {offsets = [8, 16], sizes = [8, 16], strides = [1, 1]} : vector<16x64xf32> to vector<8x16xf32>
    %55 = vector.extract_strided_slice %50 {offsets = [0, 32], sizes = [8, 16], strides = [1, 1]} : vector<16x64xf32> to vector<8x16xf32>
    %56 = vector.extract_strided_slice %50 {offsets = [8, 32], sizes = [8, 16], strides = [1, 1]} : vector<16x64xf32> to vector<8x16xf32>
    %57 = vector.extract_strided_slice %50 {offsets = [0, 48], sizes = [8, 16], strides = [1, 1]} : vector<16x64xf32> to vector<8x16xf32>
    %58 = vector.extract_strided_slice %50 {offsets = [8, 48], sizes = [8, 16], strides = [1, 1]} : vector<16x64xf32> to vector<8x16xf32>
    %59 = vector.shape_cast %51 : vector<8x16xf32> to vector<1x8x16xf32>
    %60 = vector.shape_cast %52 : vector<8x16xf32> to vector<1x8x16xf32>
    %61 = vector.shape_cast %53 : vector<8x16xf32> to vector<1x8x16xf32>
    %62 = vector.shape_cast %54 : vector<8x16xf32> to vector<1x8x16xf32>
    %63 = vector.shape_cast %55 : vector<8x16xf32> to vector<1x8x16xf32>
    %64 = vector.shape_cast %56 : vector<8x16xf32> to vector<1x8x16xf32>
    %65 = vector.shape_cast %57 : vector<8x16xf32> to vector<1x8x16xf32>
    %66 = vector.shape_cast %58 : vector<8x16xf32> to vector<1x8x16xf32>
    %67 = tpu.concatenate %59, %60, %61, %62, %63, %64, %65, %66 in 0 : vector<1x8x16xf32>, vector<1x8x16xf32>, vector<1x8x16xf32>, vector<1x8x16xf32>, vector<1x8x16xf32>, vector<1x8x16xf32>, vector<1x8x16xf32>, vector<1x8x16xf32> -> vector<8x8x16xf32>
    %68 = vector.extract_strided_slice %29 {offsets = [0, 128], sizes = [16, 64], strides = [1, 1]} : vector<16x192xf32> to vector<16x64xf32>
    %69 = vector.extract_strided_slice %68 {offsets = [0, 0], sizes = [8, 16], strides = [1, 1]} : vector<16x64xf32> to vector<8x16xf32>
    %70 = vector.extract_strided_slice %68 {offsets = [8, 0], sizes = [8, 16], strides = [1, 1]} : vector<16x64xf32> to vector<8x16xf32>
    %71 = vector.extract_strided_slice %68 {offsets = [0, 16], sizes = [8, 16], strides = [1, 1]} : vector<16x64xf32> to vector<8x16xf32>
    %72 = vector.extract_strided_slice %68 {offsets = [8, 16], sizes = [8, 16], strides = [1, 1]} : vector<16x64xf32> to vector<8x16xf32>
    %73 = vector.extract_strided_slice %68 {offsets = [0, 32], sizes = [8, 16], strides = [1, 1]} : vector<16x64xf32> to vector<8x16xf32>
    %74 = vector.extract_strided_slice %68 {offsets = [8, 32], sizes = [8, 16], strides = [1, 1]} : vector<16x64xf32> to vector<8x16xf32>
    %75 = vector.extract_strided_slice %68 {offsets = [0, 48], sizes = [8, 16], strides = [1, 1]} : vector<16x64xf32> to vector<8x16xf32>
    %76 = vector.extract_strided_slice %68 {offsets = [8, 48], sizes = [8, 16], strides = [1, 1]} : vector<16x64xf32> to vector<8x16xf32>
    %77 = vector.shape_cast %69 : vector<8x16xf32> to vector<1x8x16xf32>
    %78 = vector.shape_cast %70 : vector<8x16xf32> to vector<1x8x16xf32>
    %79 = vector.shape_cast %71 : vector<8x16xf32> to vector<1x8x16xf32>
    %80 = vector.shape_cast %72 : vector<8x16xf32> to vector<1x8x16xf32>
    %81 = vector.shape_cast %73 : vector<8x16xf32> to vector<1x8x16xf32>
    %82 = vector.shape_cast %74 : vector<8x16xf32> to vector<1x8x16xf32>
    %83 = vector.shape_cast %75 : vector<8x16xf32> to vector<1x8x16xf32>
    %84 = vector.shape_cast %76 : vector<8x16xf32> to vector<1x8x16xf32>
    %85 = tpu.concatenate %77, %78, %79, %80, %81, %82, %83, %84 in 0 : vector<1x8x16xf32>, vector<1x8x16xf32>, vector<1x8x16xf32>, vector<1x8x16xf32>, vector<1x8x16xf32>, vector<1x8x16xf32>, vector<1x8x16xf32>, vector<1x8x16xf32> -> vector<8x8x16xf32>
    "tpu.trace_start"() <{level = 10 : i32, message = "gnd,gmd->gnm"}> : () -> ()
    %cst_14 = arith.constant dense<0.000000e+00> : vector<8x8x8xf32>
    %86 = tpu.matmul %49, %67, %cst_14 {dimension_numbers = #tpu.dot_dimension_numbers<[2], [2], [1], [1], [0, 0, 0, 1, 1, 1], [0], [0]>} : vector<8x8x16xf32>, vector<8x8x16xf32>, vector<8x8x8xf32> -> vector<8x8x8xf32>
    "tpu.trace_stop"() : () -> ()
    %cst_15 = arith.constant dense<0xFF800000> : vector<8x8xf32>
    %87 = vector.multi_reduction <maximumf>, %86, %cst_15 [2] : vector<8x8x8xf32> to vector<8x8xf32>
    %88 = vector.shape_cast %87 : vector<8x8xf32> to vector<8x8x1xf32>
    %89 = vector.broadcast %88 : vector<8x8x1xf32> to vector<8x8x8xf32>
    %90 = arith.subf %86, %89 : vector<8x8x8xf32>
    %91 = math.exp %90 : vector<8x8x8xf32>
    %cst_16 = arith.constant dense<0.000000e+00> : vector<8x8xf32>
    %92 = vector.multi_reduction <add>, %91, %cst_16 [2] : vector<8x8x8xf32> to vector<8x8xf32>
    %93 = vector.shape_cast %92 : vector<8x8xf32> to vector<8x8x1xf32>
    %94 = tpu.reciprocal %93 {approx = true} : vector<8x8x1xf32> -> vector<8x8x1xf32>
    %95 = vector.broadcast %94 : vector<8x8x1xf32> to vector<8x8x8xf32>
    %96 = arith.mulf %91, %95 : vector<8x8x8xf32>
    "tpu.trace_start"() <{level = 10 : i32, message = "gnm,gmd->gnd"}> : () -> ()
    %cst_17 = arith.constant dense<0.000000e+00> : vector<8x8x16xf32>
    %97 = tpu.matmul %96, %85, %cst_17 {dimension_numbers = #tpu.dot_dimension_numbers<[2], [1], [1], [2], [0, 0, 0, 1, 1, 2], [0], [0]>} : vector<8x8x8xf32>, vector<8x8x16xf32>, vector<8x8x16xf32> -> vector<8x8x16xf32>
    "tpu.trace_stop"() : () -> ()
    %98 = vector.extract_strided_slice %97 {offsets = [0, 0, 0], sizes = [1, 8, 16], strides = [1, 1, 1]} : vector<8x8x16xf32> to vector<1x8x16xf32>
    %99 = vector.shape_cast %98 : vector<1x8x16xf32> to vector<8x16xf32>
    %100 = vector.extract_strided_slice %97 {offsets = [2, 0, 0], sizes = [1, 8, 16], strides = [1, 1, 1]} : vector<8x8x16xf32> to vector<1x8x16xf32>
    %101 = vector.shape_cast %100 : vector<1x8x16xf32> to vector<8x16xf32>
    %102 = vector.extract_strided_slice %97 {offsets = [4, 0, 0], sizes = [1, 8, 16], strides = [1, 1, 1]} : vector<8x8x16xf32> to vector<1x8x16xf32>
    %103 = vector.shape_cast %102 : vector<1x8x16xf32> to vector<8x16xf32>
    %104 = vector.extract_strided_slice %97 {offsets = [6, 0, 0], sizes = [1, 8, 16], strides = [1, 1, 1]} : vector<8x8x16xf32> to vector<1x8x16xf32>
    %105 = vector.shape_cast %104 : vector<1x8x16xf32> to vector<8x16xf32>
    %106 = tpu.concatenate %99, %101, %103, %105 in 1 : vector<8x16xf32>, vector<8x16xf32>, vector<8x16xf32>, vector<8x16xf32> -> vector<8x64xf32>
    %107 = vector.extract_strided_slice %97 {offsets = [1, 0, 0], sizes = [1, 8, 16], strides = [1, 1, 1]} : vector<8x8x16xf32> to vector<1x8x16xf32>
    %108 = vector.shape_cast %107 : vector<1x8x16xf32> to vector<8x16xf32>
    %109 = vector.extract_strided_slice %97 {offsets = [3, 0, 0], sizes = [1, 8, 16], strides = [1, 1, 1]} : vector<8x8x16xf32> to vector<1x8x16xf32>
    %110 = vector.shape_cast %109 : vector<1x8x16xf32> to vector<8x16xf32>
    %111 = vector.extract_strided_slice %97 {offsets = [5, 0, 0], sizes = [1, 8, 16], strides = [1, 1, 1]} : vector<8x8x16xf32> to vector<1x8x16xf32>
    %112 = vector.shape_cast %111 : vector<1x8x16xf32> to vector<8x16xf32>
    %113 = vector.extract_strided_slice %97 {offsets = [7, 0, 0], sizes = [1, 8, 16], strides = [1, 1, 1]} : vector<8x8x16xf32> to vector<1x8x16xf32>
    %114 = vector.shape_cast %113 : vector<1x8x16xf32> to vector<8x16xf32>
    %115 = tpu.concatenate %108, %110, %112, %114 in 1 : vector<8x16xf32>, vector<8x16xf32>, vector<8x16xf32>, vector<8x16xf32> -> vector<8x64xf32>
    %116 = tpu.concatenate %106, %115 in 0 : vector<8x64xf32>, vector<8x64xf32> -> vector<16x64xf32>
    %c0_18 = arith.constant 0 : index
    %c0_19 = arith.constant 0 : index
    %117 = vector.load %arg3[%c0_18, %c0_19] : memref<64x32xf32, #tpu.memory_space<vmem>>, vector<64x32xf32>
    %cst_20 = arith.constant dense<0.000000e+00> : vector<16x32xf32>
    %118 = tpu.matmul %116, %117, %cst_20 {dimension_numbers = #tpu.dot_dimension_numbers<[1], [0], [0], [1], [0, 0, 1, 1], [], []>} : vector<16x64xf32>, vector<64x32xf32>, vector<16x32xf32> -> vector<16x32xf32>
    %c0_21 = arith.constant 0 : index
    %c0_22 = arith.constant 0 : index
    %119 = vector.load %arg4[%c0_21, %c0_22] : memref<1x32xf32, #tpu.memory_space<vmem>>, vector<1x32xf32>
    %120 = vector.shape_cast %119 : vector<1x32xf32> to vector<32xf32>
    %121 = vector.shape_cast %120 : vector<32xf32> to vector<1x32xf32>
    %122 = vector.broadcast %121 : vector<1x32xf32> to vector<16x32xf32>
    %123 = arith.addf %118, %122 : vector<16x32xf32>
    %124 = vector.shape_cast %123 : vector<16x32xf32> to vector<2x8x32xf32>
    %125 = vector.extract_strided_slice %124 {offsets = [0, 0, 0], sizes = [2, 1, 32], strides = [1, 1, 1]} : vector<2x8x32xf32> to vector<2x1x32xf32>
    %126 = vector.shape_cast %125 : vector<2x1x32xf32> to vector<2x32xf32>
    %127 = vector.extract_strided_slice %124 {offsets = [0, 1, 0], sizes = [2, 1, 32], strides = [1, 1, 1]} : vector<2x8x32xf32> to vector<2x1x32xf32>
    %128 = vector.shape_cast %127 : vector<2x1x32xf32> to vector<2x32xf32>
    %129 = vector.extract_strided_slice %124 {offsets = [0, 2, 0], sizes = [2, 1, 32], strides = [1, 1, 1]} : vector<2x8x32xf32> to vector<2x1x32xf32>
    %130 = vector.shape_cast %129 : vector<2x1x32xf32> to vector<2x32xf32>
    %131 = vector.extract_strided_slice %124 {offsets = [0, 3, 0], sizes = [2, 1, 32], strides = [1, 1, 1]} : vector<2x8x32xf32> to vector<2x1x32xf32>
    %132 = vector.shape_cast %131 : vector<2x1x32xf32> to vector<2x32xf32>
    %133 = vector.extract_strided_slice %124 {offsets = [0, 4, 0], sizes = [2, 1, 32], strides = [1, 1, 1]} : vector<2x8x32xf32> to vector<2x1x32xf32>
    %134 = vector.shape_cast %133 : vector<2x1x32xf32> to vector<2x32xf32>
    %135 = vector.extract_strided_slice %124 {offsets = [0, 5, 0], sizes = [2, 1, 32], strides = [1, 1, 1]} : vector<2x8x32xf32> to vector<2x1x32xf32>
    %136 = vector.shape_cast %135 : vector<2x1x32xf32> to vector<2x32xf32>
    %137 = vector.extract_strided_slice %124 {offsets = [0, 6, 0], sizes = [2, 1, 32], strides = [1, 1, 1]} : vector<2x8x32xf32> to vector<2x1x32xf32>
    %138 = vector.shape_cast %137 : vector<2x1x32xf32> to vector<2x32xf32>
    %139 = vector.extract_strided_slice %124 {offsets = [0, 7, 0], sizes = [2, 1, 32], strides = [1, 1, 1]} : vector<2x8x32xf32> to vector<2x1x32xf32>
    %140 = vector.shape_cast %139 : vector<2x1x32xf32> to vector<2x32xf32>
    %141 = tpu.concatenate %126, %128, %130, %132, %134, %136, %138, %140 in 1 : vector<2x32xf32>, vector<2x32xf32>, vector<2x32xf32>, vector<2x32xf32>, vector<2x32xf32>, vector<2x32xf32>, vector<2x32xf32>, vector<2x32xf32> -> vector<2x256xf32>
    %c0_23 = arith.constant 0 : index
    %c0_24 = arith.constant 0 : index
    %142 = vector.load %arg7[%c0_23, %c0_24] : memref<2x256xf32, #tpu.memory_space<vmem>>, vector<2x256xf32>
    tpu.vector_store %arg7[%c0_23, %c0_24], %141 {strides = array<i32>} : memref<2x256xf32, #tpu.memory_space<vmem>>, vector<2x256xf32>,
    return
  }
  func.func @transform_0(%arg0: i32) -> (i32, i32, i32) {
    %c0_i32 = arith.constant 0 : i32
    %c0_i32_0 = arith.constant 0 : i32
    %c0_i32_1 = arith.constant 0 : i32
    return %arg0, %c0_i32, %c0_i32_0 : i32, i32, i32
  }
  func.func @transform_1(%arg0: i32) -> (i32, i32) {
    %c0_i32 = arith.constant 0 : i32
    %c0_i32_0 = arith.constant 0 : i32
    %c0_i32_1 = arith.constant 0 : i32
    return %c0_i32, %c0_i32_0 : i32, i32
  }
  func.func @transform_2(%arg0: i32) -> (i32, i32) {
    %c0_i32 = arith.constant 0 : i32
    %c0_i32_0 = arith.constant 0 : i32
    %c0_i32_1 = arith.constant 0 : i32
    return %c0_i32, %c0_i32_0 : i32, i32
  }
  func.func @transform_3(%arg0: i32) -> (i32, i32) {
    %c0_i32 = arith.constant 0 : i32
    %c0_i32_0 = arith.constant 0 : i32
    %c0_i32_1 = arith.constant 0 : i32
    return %c0_i32, %c0_i32_0 : i32, i32
  }
  func.func @transform_4(%arg0: i32) -> (i32, i32) {
    %c0_i32 = arith.constant 0 : i32
    %c0_i32_0 = arith.constant 0 : i32
    %c0_i32_1 = arith.constant 0 : i32
    return %c0_i32, %c0_i32_0 : i32, i32
  }
  func.func @transform_5(%arg0: i32) -> (i32, i32) {
    %c0_i32 = arith.constant 0 : i32
    %c0_i32_0 = arith.constant 0 : i32
    %c0_i32_1 = arith.constant 0 : i32
    return %c0_i32, %c0_i32_0 : i32, i32
  }
  func.func @transform_6(%arg0: i32) -> (i32, i32) {
    %c0_i32 = arith.constant 0 : i32
    %c0_i32_0 = arith.constant 0 : i32
    return %arg0, %c0_i32 : i32, i32
  }
}

</mosaic_0001>

<llo_original>
// kernel: tpu_custom_call.1
$region0: #{tpu_custom_call.1}
  #allocation0 [shape = 'u32[]', space=smem, size = 0x4, offset = 0x4, fixed_abs, tag = 'smem constant byte address 0x4 - core index']
  #allocation1 [shape = 'u32[144,128]{1,0:T(1,128)}', space=vmem, size = 0x12000, scoped, tag = 'internal scratch']
  %s0 = inlined_call_operand.vmem [shape: f32[2,8,32], index: 0, kind: input, shape index: {}]
  %s1 = inlined_call_operand.vmem [shape: f32[32,192], index: 1, kind: input, shape index: {}]
  %s2 = inlined_call_operand.vmem [shape: f32[64,32], index: 2, kind: input, shape index: {}]
  %s3 = inlined_call_operand.vmem [shape: f32[1,32], index: 3, kind: input, shape index: {}]
  %s4 = inlined_call_operand.vmem [shape: f32[1,32], index: 4, kind: input, shape index: {}]
  %s5 = inlined_call_operand.vmem [shape: f32[1,32], index: 5, kind: input, shape index: {}]
  %s6 = inlined_call_operand.hbm [shape: f32[2,256], index: 6, kind: output, shape index: {}]
  %s7 = sld [smem:[#allocation0]]
  $region34: #{tpu_custom_call.1} parent=0
    _
  %s9 = ssub.s32 1, %s7
  %s10 = scalar_select 0, %s9, %s7
  $region1: #{tpu_custom_call.1} parent=0
    #allocation2 [shape = 'u8[2048]{0}', space=vmem, size = 0x800, scoped, tag = 'output window, operand 0, single buffered']
    #allocation3 [shape = 's32[1]{0}', space=sflag, size = 0x4, scoped, tag = 'scoped memory for tpu_custom_call.1']
    %11 = vsyncpa [#allocation3], 0
    // Predicated region
    $region2: #{tpu_custom_call.1} parent=1 // pred_check
      _
    $region3: #{tpu_custom_call.1} parent=1 // pred_check_branch
      %13 = sbr.rel (0) target = $region5
    $region4: #{tpu_custom_call.1} parent=1 // pred_region
      _
    $region5: #{tpu_custom_call.1} parent=1 // pred_fallthru
      _
    // Predicated region
    $region6: #{tpu_custom_call.1} parent=1 // pred_check
      _
    $region7: #{tpu_custom_call.1} parent=1 // pred_check_branch
      %15 = sbr.rel (0) target = $region9
    $region8: #{tpu_custom_call.1} parent=1 // pred_region
      _
    $region9: #{tpu_custom_call.1} parent=1 // pred_fallthru
      _
    // Predicated region
    $region10: #{tpu_custom_call.1} parent=1 // pred_check
      _
    $region11: #{tpu_custom_call.1} parent=1 // pred_check_branch
      %17 = sbr.rel (0) target = $region13
    $region12: #{tpu_custom_call.1} parent=1 // pred_region
      _
    $region13: #{tpu_custom_call.1} parent=1 // pred_fallthru
      _
    // Predicated region
    $region14: #{tpu_custom_call.1} parent=1 // pred_check
      _
    $region15: #{tpu_custom_call.1} parent=1 // pred_check_branch
      %19 = sbr.rel (0) target = $region17
    $region16: #{tpu_custom_call.1} parent=1 // pred_region
      _
    $region17: #{tpu_custom_call.1} parent=1 // pred_fallthru
      _
    // Predicated region
    $region18: #{tpu_custom_call.1} parent=1 // pred_check
      _
    $region19: #{tpu_custom_call.1} parent=1 // pred_check_branch
      %21 = sbr.rel (0) target = $region21
    $region20: #{tpu_custom_call.1} parent=1 // pred_region
      _
    $region21: #{tpu_custom_call.1} parent=1 // pred_fallthru
      _
    // Predicated region
    $region22: #{tpu_custom_call.1} parent=1 // pred_check
      _
    $region23: #{tpu_custom_call.1} parent=1 // pred_check_branch
      %23 = sbr.rel (0) target = $region25
    $region24: #{tpu_custom_call.1} parent=1 // pred_region
      _
    $region25: #{tpu_custom_call.1} parent=1 // pred_fallthru
      _
    %v24 = vld [vmem:[%s0] sm:$0xff]
    %v25 = vld [vmem:[%s0 + $0x8] sm:$0xff]
    %vm26 = vcmask 261120
    %v27 = vsel %vm26, %v24, 0.0
    %28 = vadd.xlane.f32.xlu0 %v27
    %v29 = vpop.xlane.xlu0 %28
    %v30 = vsel %vm26, %v25, 0.0
    %31 = vadd.xlane.f32.xlu0 %v30
    %v32 = vpop.xlane.xlu0 %31
    %v33 = vrcp.pop 32.0
    %v34 = vmul.f32 %v29, %v33
    %v35 = vmul.f32 %v32, %v33
    %v36 = vsub.f32 %v24, %v34
    %v37 = vsub.f32 %v25, %v35
    %v38 = vmul.f32 %v36, %v36
    %v39 = vmul.f32 %v37, %v37
    %v40 = vsel %vm26, %v38, 0.0
    %41 = vadd.xlane.f32.xlu0 %v40
    %v42 = vpop.xlane.xlu0 %41
    %v43 = vsel %vm26, %v39, 0.0
    %44 = vadd.xlane.f32.xlu0 %v43
    %v45 = vpop.xlane.xlu0 %44
    %v46 = vmul.f32 %v42, %v33
    %v47 = vmul.f32 %v45, %v33
    %v48 = vadd.f32 %v46, 1e-05
    %v49 = vadd.f32 %v47, 1e-05
    %v50 = vrsqrt.pop %v48
    %v51 = vrsqrt.pop %v49
    %v52 = vmul.f32 %v36, %v50
    %v53 = vmul.f32 %v37, %v51
    %v54 = vld [vmem:[%s4] sm:$0x1]
    %v56 = vlaneseq
    %v57 = vshrl.u32 %v56, 7
    %v58 = vsub.s32 0, %v57
    %v59 = vrot.slane %v54, %v58
    %v61 = vmul.f32 %v52, %v59
    %v62 = vmul.f32 %v53, %v59
    %v63 = vld [vmem:[%s5] sm:$0x1]
    %v65 = vlaneseq
    %v66 = vshrl.u32 %v65, 7
    %v67 = vsub.s32 0, %v66
    %v68 = vrot.slane %v63, %v67
    %v70 = vadd.f32 %v61, %v68
    %v71 = vadd.f32 %v62, %v68
    %v72 = vld [vmem:[%s1] sm:$0xff]
    %v73 = vld [vmem:[%s1 + $0x8] sm:$0xff]
    %v74 = vld [vmem:[%s1 + $0x10] sm:$0xff]
    %v75 = vld [vmem:[%s1 + $0x18] sm:$0xff]
    %v76 = vld [vmem:[%s1 + $0x20] sm:$0xff]
    %v77 = vld [vmem:[%s1 + $0x28] sm:$0xff]
    %v78 = vld [vmem:[%s1 + $0x30] sm:$0xff]
    %v79 = vld [vmem:[%s1 + $0x38] sm:$0xff]
    %v81 = vsel %vm26, %v70, 0
    %v84 = vsel %vm26, %v71, 0
    %86 = vmatprep.subr.mxu0 %v73
    %87 = vmatpush1.msra.mxu0 %v72
    %88 = vmatprep.subr.mxu0 %v75
    %89 = vmatpush1.msra.mxu0 %v74
    %90 = vmatprep.subr.mxu0 %v77
    %91 = vmatpush1.msra.mxu0 %v76
    %92 = vmatprep.subr.mxu0 %v79
    %93 = vmatpush1.msra.mxu0 %v78
    %94 = vmatprep.subr.mxu0 0.0
    %95 = vmatpush1.msra.mxu0 0.0
    %96 = vmatprep.subr.mxu0 0.0
    %97 = vmatpush1.msra.mxu0 0.0
    %98 = vmatprep.subr.mxu0 0.0
    %99 = vmatpush1.msra.mxu0 0.0
    %100 = vmatprep.subr.mxu0 0.0
    %101 = vmatpush1.msra.mxu0 0.0
    %102 = vmatprep.subr.mxu0 0.0
    %103 = vmatpush1.msra.mxu0 0.0
    %104 = vmatprep.subr.mxu0 0.0
    %105 = vmatpush1.msra.mxu0 0.0
    %106 = vmatprep.subr.mxu0 0.0
    %107 = vmatpush1.msra.mxu0 0.0
    %108 = vmatprep.subr.mxu0 0.0
    %109 = vmatpush1.msra.mxu0 0.0
    %110 = vmatprep.subr.mxu0 0.0
    %111 = vmatpush1.msra.mxu0 0.0
    %112 = vmatprep.subr.mxu0 0.0
    %113 = vmatpush1.msra.mxu0 0.0
    %114 = vmatprep.subr.mxu0 0.0
    %115 = vmatpush1.msra.mxu0 0.0
    %116 = vmatprep.subr.mxu0 0.0
    %117 = vmatpush1.msra.mxu0 0.0
    %118 = vmatprep.subr.mxu0 0.0
    %119 = vmatpush1.msra.mxu0 0.0
    %120 = vmatprep.subr.mxu0 0.0
    %121 = vmatpush1.msra.mxu0 0.0
    %122 = vmatprep.subr.mxu0 0.0
    %123 = vmatpush1.msra.mxu0 0.0
    %124 = vmatprep.subr.mxu0 0.0
    %125 = vmatpush1.msra.mxu0 0.0
    %126 = vmatprep.subr.mxu0 0.0
    %127 = vmatpush1.msra.mxu0 0.0
    %128 = vmatprep.subr.mxu0 0.0
    %129 = vmatpush1.msra.mxu0 0.0
    %130 = vmatprep.subr.mxu0 0.0
    %131 = vmatpush1.msra.mxu0 0.0
    %132 = vmatprep.subr.mxu0 0.0
    %133 = vmatpush1.msra.mxu0 0.0
    %134 = vmatprep.subr.mxu0 0.0
    %135 = vmatpush1.msra.mxu0 0.0
    %136 = vmatprep.subr.mxu0 0.0
    %137 = vmatpush1.msra.mxu0 0.0
    %138 = vmatprep.subr.mxu0 0.0
    %139 = vmatpush1.msra.mxu0 0.0
    %140 = vmatprep.subr.mxu0 0.0
    %141 = vmatpush1.msra.mxu0 0.0
    %142 = vmatprep.subr.mxu0 0.0
    %143 = vmatpush1.msra.mxu0 0.0
    %144 = vmatprep.subr.mxu0 0.0
    %145 = vmatpush1.msra.mxu0 0.0
    %146 = vmatprep.subr.mxu0 0.0
    %147 = vmatpush1.msra.mxu0 0.0
    %148 = vmatprep.subr.mxu0 0.0
    %149 = vmatpush1.msra.mxu0 0.0
    %150 = vmatprep.mubr.f32.mxu0 0.0
    %151 = vmatmul.mubr.f32.gmra.mrb[0].mxu0 %v81
    %v152 = vpop.f32.mrb[0].mxu0
    %v153 = vadd.f32 0.0, %v152
    %v154 = vpop.f32.mrb[0].mxu0
    %v155 = vadd.f32 0.0, %v154
    %156 = vmatprep.mubr.f32.mxu0 0.0
    %157 = vmatmul.mubr.f32.gmra.mrb[0].mxu0 %v84
    %v158 = vpop.f32.mrb[0].mxu0
    %v159 = vadd.f32 0.0, %v158
    %v160 = vpop.f32.mrb[0].mxu0
    %v161 = vadd.f32 0.0, %v160
    %162 = vdwg.mxu0
    %v163 = vmul.f32 %v153, 0.25
    %v164 = vmul.f32 %v159, 0.25
    %166 = vrot.lane.b32.xlu0 %v163, 112
    %v167 = vpop.permute.xlu0 %166
    %169 = vrot.lane.b32.xlu0 %v164, 112
    %v170 = vpop.permute.xlu0 %169
    %171 = vrot.lane.b32.xlu0 %v163, 96
    %v172 = vpop.permute.xlu0 %171
    %173 = vrot.lane.b32.xlu0 %v164, 96
    %v174 = vpop.permute.xlu0 %173
    %175 = vrot.lane.b32.xlu0 %v163, 80
    %v176 = vpop.permute.xlu0 %175
    %177 = vrot.lane.b32.xlu0 %v164, 80
    %v178 = vpop.permute.xlu0 %177
    %180 = vrot.lane.b32.xlu0 %v153, 112
    %v181 = vpop.permute.xlu0 %180
    %183 = vrot.lane.b32.xlu0 %v159, 112
    %v184 = vpop.permute.xlu0 %183
    %185 = vrot.lane.b32.xlu0 %v153, 96
    %v186 = vpop.permute.xlu0 %185
    %187 = vrot.lane.b32.xlu0 %v159, 96
    %v188 = vpop.permute.xlu0 %187
    %189 = vrot.lane.b32.xlu0 %v153, 80
    %v190 = vpop.permute.xlu0 %189
    %191 = vrot.lane.b32.xlu0 %v159, 80
    %v192 = vpop.permute.xlu0 %191
    %194 = vrot.lane.b32.xlu0 %v155, 112
    %v195 = vpop.permute.xlu0 %194
    %198 = vrot.lane.b32.xlu0 %v161, 112
    %v199 = vpop.permute.xlu0 %198
    %201 = vrot.lane.b32.xlu0 %v155, 96
    %v202 = vpop.permute.xlu0 %201
    %204 = vrot.lane.b32.xlu0 %v161, 96
    %v205 = vpop.permute.xlu0 %204
    %207 = vrot.lane.b32.xlu0 %v155, 80
    %v208 = vpop.permute.xlu0 %207
    %210 = vrot.lane.b32.xlu0 %v161, 80
    %v211 = vpop.permute.xlu0 %210
    %213 = vrot.lane.b32.xlu0 %v153, 64
    %v214 = vpop.permute.xlu0 %213
    %vm215 = vcmask 130048
    %v216 = vsel %vm215, %v163, 0
    %v218 = vsel %vm215, %v214, 0
    %220 = vmatprep.subr.mxu0 0.0
    %221 = vmatpush1.xpose.msra.mxu0 %v218
    %222 = vmatprep.subr.mxu0 0.0
    %223 = vmatpush1.xpose.msra.mxu0 0.0
    %224 = vmatprep.subr.mxu0 0.0
    %225 = vmatpush1.xpose.msra.mxu0 0.0
    %226 = vmatprep.subr.mxu0 0.0
    %227 = vmatpush1.xpose.msra.mxu0 0.0
    %228 = vmatprep.subr.mxu0 0.0
    %229 = vmatpush1.xpose.msra.mxu0 0.0
    %230 = vmatprep.subr.mxu0 0.0
    %231 = vmatpush1.xpose.msra.mxu0 0.0
    %232 = vmatprep.subr.mxu0 0.0
    %233 = vmatpush1.xpose.msra.mxu0 0.0
    %234 = vmatprep.subr.mxu0 0.0
    %235 = vmatpush1.xpose.msra.mxu0 0.0
    %236 = vmatprep.subr.mxu0 0.0
    %237 = vmatpush1.xpose.msra.mxu0 0.0
    %238 = vmatprep.subr.mxu0 0.0
    %239 = vmatpush1.xpose.msra.mxu0 0.0
    %240 = vmatprep.subr.mxu0 0.0
    %241 = vmatpush1.xpose.msra.mxu0 0.0
    %242 = vmatprep.subr.mxu0 0.0
    %243 = vmatpush1.xpose.msra.mxu0 0.0
    %244 = vmatprep.subr.mxu0 0.0
    %245 = vmatpush1.xpose.msra.mxu0 0.0
    %246 = vmatprep.subr.mxu0 0.0
    %247 = vmatpush1.xpose.msra.mxu0 0.0
    %248 = vmatprep.subr.mxu0 0.0
    %249 = vmatpush1.xpose.msra.mxu0 0.0
    %250 = vmatprep.subr.mxu0 0.0
    %251 = vmatpush1.xpose.msra.mxu0 0.0
    %252 = vmatprep.subr.mxu0 0.0
    %253 = vmatpush1.xpose.msra.mxu0 0.0
    %254 = vmatprep.subr.mxu0 0.0
    %255 = vmatpush1.xpose.msra.mxu0 0.0
    %256 = vmatprep.subr.mxu0 0.0
    %257 = vmatpush1.xpose.msra.mxu0 0.0
    %258 = vmatprep.subr.mxu0 0.0
    %259 = vmatpush1.xpose.msra.mxu0 0.0
    %260 = vmatprep.subr.mxu0 0.0
    %261 = vmatpush1.xpose.msra.mxu0 0.0
    %262 = vmatprep.subr.mxu0 0.0
    %263 = vmatpush1.xpose.msra.mxu0 0.0
    %264 = vmatprep.subr.mxu0 0.0
    %265 = vmatpush1.xpose.msra.mxu0 0.0
    %266 = vmatprep.subr.mxu0 0.0
    %267 = vmatpush1.xpose.msra.mxu0 0.0
    %268 = vmatprep.subr.mxu0 0.0
    %269 = vmatpush1.xpose.msra.mxu0 0.0
    %270 = vmatprep.subr.mxu0 0.0
    %271 = vmatpush1.xpose.msra.mxu0 0.0
    %272 = vmatprep.subr.mxu0 0.0
    %273 = vmatpush1.xpose.msra.mxu0 0.0
    %274 = vmatprep.subr.mxu0 0.0
    %275 = vmatpush1.xpose.msra.mxu0 0.0
    %276 = vmatprep.subr.mxu0 0.0
    %277 = vmatpush1.xpose.msra.mxu0 0.0
    %278 = vmatprep.subr.mxu0 0.0
    %279 = vmatpush1.xpose.msra.mxu0 0.0
    %280 = vmatprep.subr.mxu0 0.0
    %281 = vmatpush1.xpose.msra.mxu0 0.0
    %282 = vmatprep.subr.mxu0 0.0
    %283 = vmatpush1.xpose.msra.mxu0 0.0
    %284 = vmatprep.mubr.f32.mxu0 0.0
    %285 = vmatmul.mubr.f32.gmra.mrb[0].mxu0 %v216
    %v286 = vpop.f32.mrb[0].mxu0
    %v287 = vadd.f32 0.0, %v286
    %v288 = vpop.f32.mrb[0].mxu0
    %289 = vdwg.mxu0
    %290 = vrot.lane.b32.xlu0 %v159, 64
    %v291 = vpop.permute.xlu0 %290
    %v292 = vsel %vm215, %v164, 0
    %v294 = vsel %vm215, %v291, 0
    %296 = vmatprep.subr.mxu0 0.0
    %297 = vmatpush1.xpose.msra.mxu0 %v294
    %298 = vmatprep.subr.mxu0 0.0
    %299 = vmatpush1.xpose.msra.mxu0 0.0
    %300 = vmatprep.subr.mxu0 0.0
    %301 = vmatpush1.xpose.msra.mxu0 0.0
    %302 = vmatprep.subr.mxu0 0.0
    %303 = vmatpush1.xpose.msra.mxu0 0.0
    %304 = vmatprep.subr.mxu0 0.0
    %305 = vmatpush1.xpose.msra.mxu0 0.0
    %306 = vmatprep.subr.mxu0 0.0
    %307 = vmatpush1.xpose.msra.mxu0 0.0
    %308 = vmatprep.subr.mxu0 0.0
    %309 = vmatpush1.xpose.msra.mxu0 0.0
    %310 = vmatprep.subr.mxu0 0.0
    %311 = vmatpush1.xpose.msra.mxu0 0.0
    %312 = vmatprep.subr.mxu0 0.0
    %313 = vmatpush1.xpose.msra.mxu0 0.0
    %314 = vmatprep.subr.mxu0 0.0
    %315 = vmatpush1.xpose.msra.mxu0 0.0
    %316 = vmatprep.subr.mxu0 0.0
    %317 = vmatpush1.xpose.msra.mxu0 0.0
    %318 = vmatprep.subr.mxu0 0.0
    %319 = vmatpush1.xpose.msra.mxu0 0.0
    %320 = vmatprep.subr.mxu0 0.0
    %321 = vmatpush1.xpose.msra.mxu0 0.0
    %322 = vmatprep.subr.mxu0 0.0
    %323 = vmatpush1.xpose.msra.mxu0 0.0
    %324 = vmatprep.subr.mxu0 0.0
    %325 = vmatpush1.xpose.msra.mxu0 0.0
    %326 = vmatprep.subr.mxu0 0.0
    %327 = vmatpush1.xpose.msra.mxu0 0.0
    %328 = vmatprep.subr.mxu0 0.0
    %329 = vmatpush1.xpose.msra.mxu0 0.0
    %330 = vmatprep.subr.mxu0 0.0
    %331 = vmatpush1.xpose.msra.mxu0 0.0
    %332 = vmatprep.subr.mxu0 0.0
    %333 = vmatpush1.xpose.msra.mxu0 0.0
    %334 = vmatprep.subr.mxu0 0.0
    %335 = vmatpush1.xpose.msra.mxu0 0.0
    %336 = vmatprep.subr.mxu0 0.0
    %337 = vmatpush1.xpose.msra.mxu0 0.0
    %338 = vmatprep.subr.mxu0 0.0
    %339 = vmatpush1.xpose.msra.mxu0 0.0
    %340 = vmatprep.subr.mxu0 0.0
    %341 = vmatpush1.xpose.msra.mxu0 0.0
    %342 = vmatprep.subr.mxu0 0.0
    %343 = vmatpush1.xpose.msra.mxu0 0.0
    %344 = vmatprep.subr.mxu0 0.0
    %345 = vmatpush1.xpose.msra.mxu0 0.0
    %346 = vmatprep.subr.mxu0 0.0
    %347 = vmatpush1.xpose.msra.mxu0 0.0
    %348 = vmatprep.subr.mxu0 0.0
    %349 = vmatpush1.xpose.msra.mxu0 0.0
    %350 = vmatprep.subr.mxu0 0.0
    %351 = vmatpush1.xpose.msra.mxu0 0.0
    %352 = vmatprep.subr.mxu0 0.0
    %353 = vmatpush1.xpose.msra.mxu0 0.0
    %354 = vmatprep.subr.mxu0 0.0
    %355 = vmatpush1.xpose.msra.mxu0 0.0
    %356 = vmatprep.subr.mxu0 0.0
    %357 = vmatpush1.xpose.msra.mxu0 0.0
    %358 = vmatprep.subr.mxu0 0.0
    %359 = vmatpush1.xpose.msra.mxu0 0.0
    %360 = vmatprep.mubr.f32.mxu0 0.0
    %361 = vmatmul.mubr.f32.gmra.mrb[0].mxu0 %v292
    %v362 = vpop.f32.mrb[0].mxu0
    %v363 = vadd.f32 0.0, %v362
    %v364 = vpop.f32.mrb[0].mxu0
    %365 = vdwg.mxu0
    %366 = vrot.lane.b32.xlu0 %v181, 64
    %v367 = vpop.permute.xlu0 %366
    %v368 = vsel %vm215, %v167, 0
    %v370 = vsel %vm215, %v367, 0
    %372 = vmatprep.subr.mxu0 0.0
    %373 = vmatpush1.xpose.msra.mxu0 %v370
    %374 = vmatprep.subr.mxu0 0.0
    %375 = vmatpush1.xpose.msra.mxu0 0.0
    %376 = vmatprep.subr.mxu0 0.0
    %377 = vmatpush1.xpose.msra.mxu0 0.0
    %378 = vmatprep.subr.mxu0 0.0
    %379 = vmatpush1.xpose.msra.mxu0 0.0
    %380 = vmatprep.subr.mxu0 0.0
    %381 = vmatpush1.xpose.msra.mxu0 0.0
    %382 = vmatprep.subr.mxu0 0.0
    %383 = vmatpush1.xpose.msra.mxu0 0.0
    %384 = vmatprep.subr.mxu0 0.0
    %385 = vmatpush1.xpose.msra.mxu0 0.0
    %386 = vmatprep.subr.mxu0 0.0
    %387 = vmatpush1.xpose.msra.mxu0 0.0
    %388 = vmatprep.subr.mxu0 0.0
    %389 = vmatpush1.xpose.msra.mxu0 0.0
    %390 = vmatprep.subr.mxu0 0.0
    %391 = vmatpush1.xpose.msra.mxu0 0.0
    %392 = vmatprep.subr.mxu0 0.0
    %393 = vmatpush1.xpose.msra.mxu0 0.0
    %394 = vmatprep.subr.mxu0 0.0
    %395 = vmatpush1.xpose.msra.mxu0 0.0
    %396 = vmatprep.subr.mxu0 0.0
    %397 = vmatpush1.xpose.msra.mxu0 0.0
    %398 = vmatprep.subr.mxu0 0.0
    %399 = vmatpush1.xpose.msra.mxu0 0.0
    %400 = vmatprep.subr.mxu0 0.0
    %401 = vmatpush1.xpose.msra.mxu0 0.0
    %402 = vmatprep.subr.mxu0 0.0
    %403 = vmatpush1.xpose.msra.mxu0 0.0
    %404 = vmatprep.subr.mxu0 0.0
    %405 = vmatpush1.xpose.msra.mxu0 0.0
    %406 = vmatprep.subr.mxu0 0.0
    %407 = vmatpush1.xpose.msra.mxu0 0.0
    %408 = vmatprep.subr.mxu0 0.0
    %409 = vmatpush1.xpose.msra.mxu0 0.0
    %410 = vmatprep.subr.mxu0 0.0
    %411 = vmatpush1.xpose.msra.mxu0 0.0
    %412 = vmatprep.subr.mxu0 0.0
    %413 = vmatpush1.xpose.msra.mxu0 0.0
    %414 = vmatprep.subr.mxu0 0.0
    %415 = vmatpush1.xpose.msra.mxu0 0.0
    %416 = vmatprep.subr.mxu0 0.0
    %417 = vmatpush1.xpose.msra.mxu0 0.0
    %418 = vmatprep.subr.mxu0 0.0
    %419 = vmatpush1.xpose.msra.mxu0 0.0
    %420 = vmatprep.subr.mxu0 0.0
    %421 = vmatpush1.xpose.msra.mxu0 0.0
    %422 = vmatprep.subr.mxu0 0.0
    %423 = vmatpush1.xpose.msra.mxu0 0.0
    %424 = vmatprep.subr.mxu0 0.0
    %425 = vmatpush1.xpose.msra.mxu0 0.0
    %426 = vmatprep.subr.mxu0 0.0
    %427 = vmatpush1.xpose.msra.mxu0 0.0
    %428 = vmatprep.subr.mxu0 0.0
    %429 = vmatpush1.xpose.msra.mxu0 0.0
    %430 = vmatprep.subr.mxu0 0.0
    %431 = vmatpush1.xpose.msra.mxu0 0.0
    %432 = vmatprep.subr.mxu0 0.0
    %433 = vmatpush1.xpose.msra.mxu0 0.0
    %434 = vmatprep.subr.mxu0 0.0
    %435 = vmatpush1.xpose.msra.mxu0 0.0
    %436 = vmatprep.mubr.f32.mxu0 0.0
    %437 = vmatmul.mubr.f32.gmra.mrb[0].mxu0 %v368
    %v438 = vpop.f32.mrb[0].mxu0
    %v439 = vadd.f32 0.0, %v438
    %v440 = vpop.f32.mrb[0].mxu0
    %441 = vdwg.mxu0
    %442 = vrot.lane.b32.xlu0 %v184, 64
    %v443 = vpop.permute.xlu0 %442
    %v444 = vsel %vm215, %v170, 0
    %v446 = vsel %vm215, %v443, 0
    %448 = vmatprep.subr.mxu0 0.0
    %449 = vmatpush1.xpose.msra.mxu0 %v446
    %450 = vmatprep.subr.mxu0 0.0
    %451 = vmatpush1.xpose.msra.mxu0 0.0
    %452 = vmatprep.subr.mxu0 0.0
    %453 = vmatpush1.xpose.msra.mxu0 0.0
    %454 = vmatprep.subr.mxu0 0.0
    %455 = vmatpush1.xpose.msra.mxu0 0.0
    %456 = vmatprep.subr.mxu0 0.0
    %457 = vmatpush1.xpose.msra.mxu0 0.0
    %458 = vmatprep.subr.mxu0 0.0
    %459 = vmatpush1.xpose.msra.mxu0 0.0
    %460 = vmatprep.subr.mxu0 0.0
    %461 = vmatpush1.xpose.msra.mxu0 0.0
    %462 = vmatprep.subr.mxu0 0.0
    %463 = vmatpush1.xpose.msra.mxu0 0.0
    %464 = vmatprep.subr.mxu0 0.0
    %465 = vmatpush1.xpose.msra.mxu0 0.0
    %466 = vmatprep.subr.mxu0 0.0
    %467 = vmatpush1.xpose.msra.mxu0 0.0
    %468 = vmatprep.subr.mxu0 0.0
    %469 = vmatpush1.xpose.msra.mxu0 0.0
    %470 = vmatprep.subr.mxu0 0.0
    %471 = vmatpush1.xpose.msra.mxu0 0.0
    %472 = vmatprep.subr.mxu0 0.0
    %473 = vmatpush1.xpose.msra.mxu0 0.0
    %474 = vmatprep.subr.mxu0 0.0
    %475 = vmatpush1.xpose.msra.mxu0 0.0
    %476 = vmatprep.subr.mxu0 0.0
    %477 = vmatpush1.xpose.msra.mxu0 0.0
    %478 = vmatprep.subr.mxu0 0.0
    %479 = vmatpush1.xpose.msra.mxu0 0.0
    %480 = vmatprep.subr.mxu0 0.0
    %481 = vmatpush1.xpose.msra.mxu0 0.0
    %482 = vmatprep.subr.mxu0 0.0
    %483 = vmatpush1.xpose.msra.mxu0 0.0
    %484 = vmatprep.subr.mxu0 0.0
    %485 = vmatpush1.xpose.msra.mxu0 0.0
    %486 = vmatprep.subr.mxu0 0.0
    %487 = vmatpush1.xpose.msra.mxu0 0.0
    %488 = vmatprep.subr.mxu0 0.0
    %489 = vmatpush1.xpose.msra.mxu0 0.0
    %490 = vmatprep.subr.mxu0 0.0
    %491 = vmatpush1.xpose.msra.mxu0 0.0
    %492 = vmatprep.subr.mxu0 0.0
    %493 = vmatpush1.xpose.msra.mxu0 0.0
    %494 = vmatprep.subr.mxu0 0.0
    %495 = vmatpush1.xpose.msra.mxu0 0.0
    %496 = vmatprep.subr.mxu0 0.0
    %497 = vmatpush1.xpose.msra.mxu0 0.0
    %498 = vmatprep.subr.mxu0 0.0
    %499 = vmatpush1.xpose.msra.mxu0 0.0
    %500 = vmatprep.subr.mxu0 0.0
    %501 = vmatpush1.xpose.msra.mxu0 0.0
    %502 = vmatprep.subr.mxu0 0.0
    %503 = vmatpush1.xpose.msra.mxu0 0.0
    %504 = vmatprep.subr.mxu0 0.0
    %505 = vmatpush1.xpose.msra.mxu0 0.0
    %506 = vmatprep.subr.mxu0 0.0
    %507 = vmatpush1.xpose.msra.mxu0 0.0
    %508 = vmatprep.subr.mxu0 0.0
    %509 = vmatpush1.xpose.msra.mxu0 0.0
    %510 = vmatprep.subr.mxu0 0.0
    %511 = vmatpush1.xpose.msra.mxu0 0.0
    %512 = vmatprep.mubr.f32.mxu0 0.0
    %513 = vmatmul.mubr.f32.gmra.mrb[0].mxu0 %v444
    %v514 = vpop.f32.mrb[0].mxu0
    %v515 = vadd.f32 0.0, %v514
    %v516 = vpop.f32.mrb[0].mxu0
    %517 = vdwg.mxu0
    %518 = vrot.lane.b32.xlu0 %v186, 64
    %v519 = vpop.permute.xlu0 %518
    %v520 = vsel %vm215, %v172, 0
    %v522 = vsel %vm215, %v519, 0
    %524 = vmatprep.subr.mxu0 0.0
    %525 = vmatpush1.xpose.msra.mxu0 %v522
    %526 = vmatprep.subr.mxu0 0.0
    %527 = vmatpush1.xpose.msra.mxu0 0.0
    %528 = vmatprep.subr.mxu0 0.0
    %529 = vmatpush1.xpose.msra.mxu0 0.0
    %530 = vmatprep.subr.mxu0 0.0
    %531 = vmatpush1.xpose.msra.mxu0 0.0
    %532 = vmatprep.subr.mxu0 0.0
    %533 = vmatpush1.xpose.msra.mxu0 0.0
    %534 = vmatprep.subr.mxu0 0.0
    %535 = vmatpush1.xpose.msra.mxu0 0.0
    %536 = vmatprep.subr.mxu0 0.0
    %537 = vmatpush1.xpose.msra.mxu0 0.0
    %538 = vmatprep.subr.mxu0 0.0
    %539 = vmatpush1.xpose.msra.mxu0 0.0
    %540 = vmatprep.subr.mxu0 0.0
    %541 = vmatpush1.xpose.msra.mxu0 0.0
    %542 = vmatprep.subr.mxu0 0.0
    %543 = vmatpush1.xpose.msra.mxu0 0.0
    %544 = vmatprep.subr.mxu0 0.0
    %545 = vmatpush1.xpose.msra.mxu0 0.0
    %546 = vmatprep.subr.mxu0 0.0
    %547 = vmatpush1.xpose.msra.mxu0 0.0
    %548 = vmatprep.subr.mxu0 0.0
    %549 = vmatpush1.xpose.msra.mxu0 0.0
    %550 = vmatprep.subr.mxu0 0.0
    %551 = vmatpush1.xpose.msra.mxu0 0.0
    %552 = vmatprep.subr.mxu0 0.0
    %553 = vmatpush1.xpose.msra.mxu0 0.0
    %554 = vmatprep.subr.mxu0 0.0
    %555 = vmatpush1.xpose.msra.mxu0 0.0
    %556 = vmatprep.subr.mxu0 0.0
    %557 = vmatpush1.xpose.msra.mxu0 0.0
    %558 = vmatprep.subr.mxu0 0.0
    %559 = vmatpush1.xpose.msra.mxu0 0.0
    %560 = vmatprep.subr.mxu0 0.0
    %561 = vmatpush1.xpose.msra.mxu0 0.0
    %562 = vmatprep.subr.mxu0 0.0
    %563 = vmatpush1.xpose.msra.mxu0 0.0
    %564 = vmatprep.subr.mxu0 0.0
    %565 = vmatpush1.xpose.msra.mxu0 0.0
    %566 = vmatprep.subr.mxu0 0.0
    %567 = vmatpush1.xpose.msra.mxu0 0.0
    %568 = vmatprep.subr.mxu0 0.0
    %569 = vmatpush1.xpose.msra.mxu0 0.0
    %570 = vmatprep.subr.mxu0 0.0
    %571 = vmatpush1.xpose.msra.mxu0 0.0
    %572 = vmatprep.subr.mxu0 0.0
    %573 = vmatpush1.xpose.msra.mxu0 0.0
    %574 = vmatprep.subr.mxu0 0.0
    %575 = vmatpush1.xpose.msra.mxu0 0.0
    %576 = vmatprep.subr.mxu0 0.0
    %577 = vmatpush1.xpose.msra.mxu0 0.0
    %578 = vmatprep.subr.mxu0 0.0
    %579 = vmatpush1.xpose.msra.mxu0 0.0
    %580 = vmatprep.subr.mxu0 0.0
    %581 = vmatpush1.xpose.msra.mxu0 0.0
    %582 = vmatprep.subr.mxu0 0.0
    %583 = vmatpush1.xpose.msra.mxu0 0.0
    %584 = vmatprep.subr.mxu0 0.0
    %585 = vmatpush1.xpose.msra.mxu0 0.0
    %586 = vmatprep.subr.mxu0 0.0
    %587 = vmatpush1.xpose.msra.mxu0 0.0
    %588 = vmatprep.mubr.f32.mxu0 0.0
    %589 = vmatmul.mubr.f32.gmra.mrb[0].mxu0 %v520
    %v590 = vpop.f32.mrb[0].mxu0
    %v591 = vadd.f32 0.0, %v590
    %v592 = vpop.f32.mrb[0].mxu0
    %593 = vdwg.mxu0
    %594 = vrot.lane.b32.xlu0 %v188, 64
    %v595 = vpop.permute.xlu0 %594
    %v596 = vsel %vm215, %v174, 0
    %v598 = vsel %vm215, %v595, 0
    %600 = vmatprep.subr.mxu0 0.0
    %601 = vmatpush1.xpose.msra.mxu0 %v598
    %602 = vmatprep.subr.mxu0 0.0
    %603 = vmatpush1.xpose.msra.mxu0 0.0
    %604 = vmatprep.subr.mxu0 0.0
    %605 = vmatpush1.xpose.msra.mxu0 0.0
    %606 = vmatprep.subr.mxu0 0.0
    %607 = vmatpush1.xpose.msra.mxu0 0.0
    %608 = vmatprep.subr.mxu0 0.0
    %609 = vmatpush1.xpose.msra.mxu0 0.0
    %610 = vmatprep.subr.mxu0 0.0
    %611 = vmatpush1.xpose.msra.mxu0 0.0
    %612 = vmatprep.subr.mxu0 0.0
    %613 = vmatpush1.xpose.msra.mxu0 0.0
    %614 = vmatprep.subr.mxu0 0.0
    %615 = vmatpush1.xpose.msra.mxu0 0.0
    %616 = vmatprep.subr.mxu0 0.0
    %617 = vmatpush1.xpose.msra.mxu0 0.0
    %618 = vmatprep.subr.mxu0 0.0
    %619 = vmatpush1.xpose.msra.mxu0 0.0
    %620 = vmatprep.subr.mxu0 0.0
    %621 = vmatpush1.xpose.msra.mxu0 0.0
    %622 = vmatprep.subr.mxu0 0.0
    %623 = vmatpush1.xpose.msra.mxu0 0.0
    %624 = vmatprep.subr.mxu0 0.0
    %625 = vmatpush1.xpose.msra.mxu0 0.0
    %626 = vmatprep.subr.mxu0 0.0
    %627 = vmatpush1.xpose.msra.mxu0 0.0
    %628 = vmatprep.subr.mxu0 0.0
    %629 = vmatpush1.xpose.msra.mxu0 0.0
    %630 = vmatprep.subr.mxu0 0.0
    %631 = vmatpush1.xpose.msra.mxu0 0.0
    %632 = vmatprep.subr.mxu0 0.0
    %633 = vmatpush1.xpose.msra.mxu0 0.0
    %634 = vmatprep.subr.mxu0 0.0
    %635 = vmatpush1.xpose.msra.mxu0 0.0
    %636 = vmatprep.subr.mxu0 0.0
    %637 = vmatpush1.xpose.msra.mxu0 0.0
    %638 = vmatprep.subr.mxu0 0.0
    %639 = vmatpush1.xpose.msra.mxu0 0.0
    %640 = vmatprep.subr.mxu0 0.0
    %641 = vmatpush1.xpose.msra.mxu0 0.0
    %642 = vmatprep.subr.mxu0 0.0
    %643 = vmatpush1.xpose.msra.mxu0 0.0
    %644 = vmatprep.subr.mxu0 0.0
    %645 = vmatpush1.xpose.msra.mxu0 0.0
    %646 = vmatprep.subr.mxu0 0.0
    %647 = vmatpush1.xpose.msra.mxu0 0.0
    %648 = vmatprep.subr.mxu0 0.0
    %649 = vmatpush1.xpose.msra.mxu0 0.0
    %650 = vmatprep.subr.mxu0 0.0
    %651 = vmatpush1.xpose.msra.mxu0 0.0
    %652 = vmatprep.subr.mxu0 0.0
    %653 = vmatpush1.xpose.msra.mxu0 0.0
    %654 = vmatprep.subr.mxu0 0.0
    %655 = vmatpush1.xpose.msra.mxu0 0.0
    %656 = vmatprep.subr.mxu0 0.0
    %657 = vmatpush1.xpose.msra.mxu0 0.0
    %658 = vmatprep.subr.mxu0 0.0
    %659 = vmatpush1.xpose.msra.mxu0 0.0
    %660 = vmatprep.subr.mxu0 0.0
    %661 = vmatpush1.xpose.msra.mxu0 0.0
    %662 = vmatprep.subr.mxu0 0.0
    %663 = vmatpush1.xpose.msra.mxu0 0.0
    %664 = vmatprep.mubr.f32.mxu0 0.0
    %665 = vmatmul.mubr.f32.gmra.mrb[0].mxu0 %v596
    %v666 = vpop.f32.mrb[0].mxu0
    %v667 = vadd.f32 0.0, %v666
    %v668 = vpop.f32.mrb[0].mxu0
    %669 = vdwg.mxu0
    %670 = vrot.lane.b32.xlu0 %v190, 64
    %v671 = vpop.permute.xlu0 %670
    %v672 = vsel %vm215, %v176, 0
    %v674 = vsel %vm215, %v671, 0
    %676 = vmatprep.subr.mxu0 0.0
    %677 = vmatpush1.xpose.msra.mxu0 %v674
    %678 = vmatprep.subr.mxu0 0.0
    %679 = vmatpush1.xpose.msra.mxu0 0.0
    %680 = vmatprep.subr.mxu0 0.0
    %681 = vmatpush1.xpose.msra.mxu0 0.0
    %682 = vmatprep.subr.mxu0 0.0
    %683 = vmatpush1.xpose.msra.mxu0 0.0
    %684 = vmatprep.subr.mxu0 0.0
    %685 = vmatpush1.xpose.msra.mxu0 0.0
    %686 = vmatprep.subr.mxu0 0.0
    %687 = vmatpush1.xpose.msra.mxu0 0.0
    %688 = vmatprep.subr.mxu0 0.0
    %689 = vmatpush1.xpose.msra.mxu0 0.0
    %690 = vmatprep.subr.mxu0 0.0
    %691 = vmatpush1.xpose.msra.mxu0 0.0
    %692 = vmatprep.subr.mxu0 0.0
    %693 = vmatpush1.xpose.msra.mxu0 0.0
    %694 = vmatprep.subr.mxu0 0.0
    %695 = vmatpush1.xpose.msra.mxu0 0.0
    %696 = vmatprep.subr.mxu0 0.0
    %697 = vmatpush1.xpose.msra.mxu0 0.0
    %698 = vmatprep.subr.mxu0 0.0
    %699 = vmatpush1.xpose.msra.mxu0 0.0
    %700 = vmatprep.subr.mxu0 0.0
    %701 = vmatpush1.xpose.msra.mxu0 0.0
    %702 = vmatprep.subr.mxu0 0.0
    %703 = vmatpush1.xpose.msra.mxu0 0.0
    %704 = vmatprep.subr.mxu0 0.0
    %705 = vmatpush1.xpose.msra.mxu0 0.0
    %706 = vmatprep.subr.mxu0 0.0
    %707 = vmatpush1.xpose.msra.mxu0 0.0
    %708 = vmatprep.subr.mxu0 0.0
    %709 = vmatpush1.xpose.msra.mxu0 0.0
    %710 = vmatprep.subr.mxu0 0.0
    %711 = vmatpush1.xpose.msra.mxu0 0.0
    %712 = vmatprep.subr.mxu0 0.0
    %713 = vmatpush1.xpose.msra.mxu0 0.0
    %714 = vmatprep.subr.mxu0 0.0
    %715 = vmatpush1.xpose.msra.mxu0 0.0
    %716 = vmatprep.subr.mxu0 0.0
    %717 = vmatpush1.xpose.msra.mxu0 0.0
    %718 = vmatprep.subr.mxu0 0.0
    %719 = vmatpush1.xpose.msra.mxu0 0.0
    %720 = vmatprep.subr.mxu0 0.0
    %721 = vmatpush1.xpose.msra.mxu0 0.0
    %722 = vmatprep.subr.mxu0 0.0
    %723 = vmatpush1.xpose.msra.mxu0 0.0
    %724 = vmatprep.subr.mxu0 0.0
    %725 = vmatpush1.xpose.msra.mxu0 0.0
    %726 = vmatprep.subr.mxu0 0.0
    %727 = vmatpush1.xpose.msra.mxu0 0.0
    %728 = vmatprep.subr.mxu0 0.0
    %729 = vmatpush1.xpose.msra.mxu0 0.0
    %730 = vmatprep.subr.mxu0 0.0
    %731 = vmatpush1.xpose.msra.mxu0 0.0
    %732 = vmatprep.subr.mxu0 0.0
    %733 = vmatpush1.xpose.msra.mxu0 0.0
    %734 = vmatprep.subr.mxu0 0.0
    %735 = vmatpush1.xpose.msra.mxu0 0.0
    %736 = vmatprep.subr.mxu0 0.0
    %737 = vmatpush1.xpose.msra.mxu0 0.0
    %738 = vmatprep.subr.mxu0 0.0
    %739 = vmatpush1.xpose.msra.mxu0 0.0
    %740 = vmatprep.mubr.f32.mxu0 0.0
    %741 = vmatmul.mubr.f32.gmra.mrb[0].mxu0 %v672
    %v742 = vpop.f32.mrb[0].mxu0
    %v743 = vadd.f32 0.0, %v742
    %v744 = vpop.f32.mrb[0].mxu0
    %745 = vdwg.mxu0
    %746 = vrot.lane.b32.xlu0 %v192, 64
    %v747 = vpop.permute.xlu0 %746
    %v748 = vsel %vm215, %v178, 0
    %v750 = vsel %vm215, %v747, 0
    %752 = vmatprep.subr.mxu0 0.0
    %753 = vmatpush1.xpose.msra.mxu0 %v750
    %754 = vmatprep.subr.mxu0 0.0
    %755 = vmatpush1.xpose.msra.mxu0 0.0
    %756 = vmatprep.subr.mxu0 0.0
    %757 = vmatpush1.xpose.msra.mxu0 0.0
    %758 = vmatprep.subr.mxu0 0.0
    %759 = vmatpush1.xpose.msra.mxu0 0.0
    %760 = vmatprep.subr.mxu0 0.0
    %761 = vmatpush1.xpose.msra.mxu0 0.0
    %762 = vmatprep.subr.mxu0 0.0
    %763 = vmatpush1.xpose.msra.mxu0 0.0
    %764 = vmatprep.subr.mxu0 0.0
    %765 = vmatpush1.xpose.msra.mxu0 0.0
    %766 = vmatprep.subr.mxu0 0.0
    %767 = vmatpush1.xpose.msra.mxu0 0.0
    %768 = vmatprep.subr.mxu0 0.0
    %769 = vmatpush1.xpose.msra.mxu0 0.0
    %770 = vmatprep.subr.mxu0 0.0
    %771 = vmatpush1.xpose.msra.mxu0 0.0
    %772 = vmatprep.subr.mxu0 0.0
    %773 = vmatpush1.xpose.msra.mxu0 0.0
    %774 = vmatprep.subr.mxu0 0.0
    %775 = vmatpush1.xpose.msra.mxu0 0.0
    %776 = vmatprep.subr.mxu0 0.0
    %777 = vmatpush1.xpose.msra.mxu0 0.0
    %778 = vmatprep.subr.mxu0 0.0
    %779 = vmatpush1.xpose.msra.mxu0 0.0
    %780 = vmatprep.subr.mxu0 0.0
    %781 = vmatpush1.xpose.msra.mxu0 0.0
    %782 = vmatprep.subr.mxu0 0.0
    %783 = vmatpush1.xpose.msra.mxu0 0.0
    %784 = vmatprep.subr.mxu0 0.0
    %785 = vmatpush1.xpose.msra.mxu0 0.0
    %786 = vmatprep.subr.mxu0 0.0
    %787 = vmatpush1.xpose.msra.mxu0 0.0
    %788 = vmatprep.subr.mxu0 0.0
    %789 = vmatpush1.xpose.msra.mxu0 0.0
    %790 = vmatprep.subr.mxu0 0.0
    %791 = vmatpush1.xpose.msra.mxu0 0.0
    %792 = vmatprep.subr.mxu0 0.0
    %793 = vmatpush1.xpose.msra.mxu0 0.0
    %794 = vmatprep.subr.mxu0 0.0
    %795 = vmatpush1.xpose.msra.mxu0 0.0
    %796 = vmatprep.subr.mxu0 0.0
    %797 = vmatpush1.xpose.msra.mxu0 0.0
    %798 = vmatprep.subr.mxu0 0.0
    %799 = vmatpush1.xpose.msra.mxu0 0.0
    %800 = vmatprep.subr.mxu0 0.0
    %801 = vmatpush1.xpose.msra.mxu0 0.0
    %802 = vmatprep.subr.mxu0 0.0
    %803 = vmatpush1.xpose.msra.mxu0 0.0
    %804 = vmatprep.subr.mxu0 0.0
    %805 = vmatpush1.xpose.msra.mxu0 0.0
    %806 = vmatprep.subr.mxu0 0.0
    %807 = vmatpush1.xpose.msra.mxu0 0.0
    %808 = vmatprep.subr.mxu0 0.0
    %809 = vmatpush1.xpose.msra.mxu0 0.0
    %810 = vmatprep.subr.mxu0 0.0
    %811 = vmatpush1.xpose.msra.mxu0 0.0
    %812 = vmatprep.subr.mxu0 0.0
    %813 = vmatpush1.xpose.msra.mxu0 0.0
    %814 = vmatprep.subr.mxu0 0.0
    %815 = vmatpush1.xpose.msra.mxu0 0.0
    %816 = vmatprep.mubr.f32.mxu0 0.0
    %817 = vmatmul.mubr.f32.gmra.mrb[0].mxu0 %v748
    %v818 = vpop.f32.mrb[0].mxu0
    %v819 = vadd.f32 0.0, %v818
    %v820 = vpop.f32.mrb[0].mxu0
    %821 = vdwg.mxu0
    %vm822 = vcmask 64512
    %v823 = vsel %vm822, %v287, -inf
    %824 = vmax.xlane.f32.xlu0 %v823
    %v825 = vpop.xlane.xlu0 %824
    %v826 = vsel %vm822, %v363, -inf
    %827 = vmax.xlane.f32.xlu0 %v826
    %v828 = vpop.xlane.xlu0 %827
    %v829 = vsel %vm822, %v439, -inf
    %830 = vmax.xlane.f32.xlu0 %v829
    %v831 = vpop.xlane.xlu0 %830
    %v832 = vsel %vm822, %v515, -inf
    %833 = vmax.xlane.f32.xlu0 %v832
    %v834 = vpop.xlane.xlu0 %833
    %v835 = vsel %vm822, %v591, -inf
    %836 = vmax.xlane.f32.xlu0 %v835
    %v837 = vpop.xlane.xlu0 %836
    %v838 = vsel %vm822, %v667, -inf
    %839 = vmax.xlane.f32.xlu0 %v838
    %v840 = vpop.xlane.xlu0 %839
    %v841 = vsel %vm822, %v743, -inf
    %842 = vmax.xlane.f32.xlu0 %v841
    %v843 = vpop.xlane.xlu0 %842
    %v844 = vsel %vm822, %v819, -inf
    %845 = vmax.xlane.f32.xlu0 %v844
    %v846 = vpop.xlane.xlu0 %845
    %v847 = vsub.f32 %v287, %v825
    %v848 = vsub.f32 %v363, %v828
    %v849 = vsub.f32 %v439, %v831
    %v850 = vsub.f32 %v515, %v834
    %v851 = vsub.f32 %v591, %v837
    %v852 = vsub.f32 %v667, %v840
    %v853 = vsub.f32 %v743, %v843
    %v854 = vsub.f32 %v819, %v846
    %v855 = vmul.f32 %v847, 1.442695
    %v856 = vpow.pop %v855
    %v857 = vmul.f32 %v848, 1.442695
    %v858 = vpow.pop %v857
    %v859 = vmul.f32 %v849, 1.442695
    %v860 = vpow.pop %v859
    %v861 = vmul.f32 %v850, 1.442695
    %v862 = vpow.pop %v861
    %v863 = vmul.f32 %v851, 1.442695
    %v864 = vpow.pop %v863
    %v865 = vmul.f32 %v852, 1.442695
    %v866 = vpow.pop %v865
    %v867 = vmul.f32 %v853, 1.442695
    %v868 = vpow.pop %v867
    %v869 = vmul.f32 %v854, 1.442695
    %v870 = vpow.pop %v869
    %v871 = vsel %vm822, %v856, 0.0
    %872 = vadd.xlane.f32.xlu0 %v871
    %v873 = vpop.xlane.xlu0 %872
    %v874 = vsel %vm822, %v858, 0.0
    %875 = vadd.xlane.f32.xlu0 %v874
    %v876 = vpop.xlane.xlu0 %875
    %v877 = vsel %vm822, %v860, 0.0
    %878 = vadd.xlane.f32.xlu0 %v877
    %v879 = vpop.xlane.xlu0 %878
    %v880 = vsel %vm822, %v862, 0.0
    %881 = vadd.xlane.f32.xlu0 %v880
    %v882 = vpop.xlane.xlu0 %881
    %v883 = vsel %vm822, %v864, 0.0
    %884 = vadd.xlane.f32.xlu0 %v883
    %v885 = vpop.xlane.xlu0 %884
    %v886 = vsel %vm822, %v866, 0.0
    %887 = vadd.xlane.f32.xlu0 %v886
    %v888 = vpop.xlane.xlu0 %887
    %v889 = vsel %vm822, %v868, 0.0
    %890 = vadd.xlane.f32.xlu0 %v889
    %v891 = vpop.xlane.xlu0 %890
    %v892 = vsel %vm822, %v870, 0.0
    %893 = vadd.xlane.f32.xlu0 %v892
    %v894 = vpop.xlane.xlu0 %893
    %v895 = vrcp.pop %v873
    %v896 = vrcp.pop %v876
    %v897 = vrcp.pop %v879
    %v898 = vrcp.pop %v882
    %v899 = vrcp.pop %v885
    %v900 = vrcp.pop %v888
    %v901 = vrcp.pop %v891
    %v902 = vrcp.pop %v894
    %v903 = vmul.f32 %v856, %v895
    %v904 = vmul.f32 %v858, %v896
    %v905 = vmul.f32 %v860, %v897
    %v906 = vmul.f32 %v862, %v898
    %v907 = vmul.f32 %v864, %v899
    %v908 = vmul.f32 %v866, %v900
    %v909 = vmul.f32 %v868, %v901
    %v910 = vmul.f32 %v870, %v902
    %v912 = vsel %vm822, %v903, 0
    %914 = vmatprep.subr.mxu0 0.0
    %915 = vmatpush1.msra.mxu0 %v155
    %916 = vmatprep.subr.mxu0 0.0
    %917 = vmatpush1.msra.mxu0 0.0
    %918 = vmatprep.subr.mxu0 0.0
    %919 = vmatpush1.msra.mxu0 0.0
    %920 = vmatprep.subr.mxu0 0.0
    %921 = vmatpush1.msra.mxu0 0.0
    %922 = vmatprep.subr.mxu0 0.0
    %923 = vmatpush1.msra.mxu0 0.0
    %924 = vmatprep.subr.mxu0 0.0
    %925 = vmatpush1.msra.mxu0 0.0
    %926 = vmatprep.subr.mxu0 0.0
    %927 = vmatpush1.msra.mxu0 0.0
    %928 = vmatprep.subr.mxu0 0.0
    %929 = vmatpush1.msra.mxu0 0.0
    %930 = vmatprep.subr.mxu0 0.0
    %931 = vmatpush1.msra.mxu0 0.0
    %932 = vmatprep.subr.mxu0 0.0
    %933 = vmatpush1.msra.mxu0 0.0
    %934 = vmatprep.subr.mxu0 0.0
    %935 = vmatpush1.msra.mxu0 0.0
    %936 = vmatprep.subr.mxu0 0.0
    %937 = vmatpush1.msra.mxu0 0.0
    %938 = vmatprep.subr.mxu0 0.0
    %939 = vmatpush1.msra.mxu0 0.0
    %940 = vmatprep.subr.mxu0 0.0
    %941 = vmatpush1.msra.mxu0 0.0
    %942 = vmatprep.subr.mxu0 0.0
    %943 = vmatpush1.msra.mxu0 0.0
    %944 = vmatprep.subr.mxu0 0.0
    %945 = vmatpush1.msra.mxu0 0.0
    %946 = vmatprep.subr.mxu0 0.0
    %947 = vmatpush1.msra.mxu0 0.0
    %948 = vmatprep.subr.mxu0 0.0
    %949 = vmatpush1.msra.mxu0 0.0
    %950 = vmatprep.subr.mxu0 0.0
    %951 = vmatpush1.msra.mxu0 0.0
    %952 = vmatprep.subr.mxu0 0.0
    %953 = vmatpush1.msra.mxu0 0.0
    %954 = vmatprep.subr.mxu0 0.0
    %955 = vmatpush1.msra.mxu0 0.0
    %956 = vmatprep.subr.mxu0 0.0
    %957 = vmatpush1.msra.mxu0 0.0
    %958 = vmatprep.subr.mxu0 0.0
    %959 = vmatpush1.msra.mxu0 0.0
    %960 = vmatprep.subr.mxu0 0.0
    %961 = vmatpush1.msra.mxu0 0.0
    %962 = vmatprep.subr.mxu0 0.0
    %963 = vmatpush1.msra.mxu0 0.0
    %964 = vmatprep.subr.mxu0 0.0
    %965 = vmatpush1.msra.mxu0 0.0
    %966 = vmatprep.subr.mxu0 0.0
    %967 = vmatpush1.msra.mxu0 0.0
    %968 = vmatprep.subr.mxu0 0.0
    %969 = vmatpush1.msra.mxu0 0.0
    %970 = vmatprep.subr.mxu0 0.0
    %971 = vmatpush1.msra.mxu0 0.0
    %972 = vmatprep.subr.mxu0 0.0
    %973 = vmatpush1.msra.mxu0 0.0
    %974 = vmatprep.subr.mxu0 0.0
    %975 = vmatpush1.msra.mxu0 0.0
    %976 = vmatprep.subr.mxu0 0.0
    %977 = vmatpush1.msra.mxu0 0.0
    %978 = vmatprep.mubr.f32.mxu0 0.0
    %979 = vmatmul.mubr.f32.gmra.mrb[0].mxu0 %v912
    %v980 = vpop.f32.mrb[0].mxu0
    %v981 = vadd.f32 0.0, %v980
    %v982 = vpop.f32.mrb[0].mxu0
    %983 = vdwg.mxu0
    %v985 = vsel %vm822, %v904, 0
    %987 = vmatprep.subr.mxu0 0.0
    %988 = vmatpush1.msra.mxu0 %v161
    %989 = vmatprep.subr.mxu0 0.0
    %990 = vmatpush1.msra.mxu0 0.0
    %991 = vmatprep.subr.mxu0 0.0
    %992 = vmatpush1.msra.mxu0 0.0
    %993 = vmatprep.subr.mxu0 0.0
    %994 = vmatpush1.msra.mxu0 0.0
    %995 = vmatprep.subr.mxu0 0.0
    %996 = vmatpush1.msra.mxu0 0.0
    %997 = vmatprep.subr.mxu0 0.0
    %998 = vmatpush1.msra.mxu0 0.0
    %999 = vmatprep.subr.mxu0 0.0
    %1000 = vmatpush1.msra.mxu0 0.0
    %1001 = vmatprep.subr.mxu0 0.0
    %1002 = vmatpush1.msra.mxu0 0.0
    %1003 = vmatprep.subr.mxu0 0.0
    %1004 = vmatpush1.msra.mxu0 0.0
    %1005 = vmatprep.subr.mxu0 0.0
    %1006 = vmatpush1.msra.mxu0 0.0
    %1007 = vmatprep.subr.mxu0 0.0
    %1008 = vmatpush1.msra.mxu0 0.0
    %1009 = vmatprep.subr.mxu0 0.0
    %1010 = vmatpush1.msra.mxu0 0.0
    %1011 = vmatprep.subr.mxu0 0.0
    %1012 = vmatpush1.msra.mxu0 0.0
    %1013 = vmatprep.subr.mxu0 0.0
    %1014 = vmatpush1.msra.mxu0 0.0
    %1015 = vmatprep.subr.mxu0 0.0
    %1016 = vmatpush1.msra.mxu0 0.0
    %1017 = vmatprep.subr.mxu0 0.0
    %1018 = vmatpush1.msra.mxu0 0.0
    %1019 = vmatprep.subr.mxu0 0.0
    %1020 = vmatpush1.msra.mxu0 0.0
    %1021 = vmatprep.subr.mxu0 0.0
    %1022 = vmatpush1.msra.mxu0 0.0
    %1023 = vmatprep.subr.mxu0 0.0
    %1024 = vmatpush1.msra.mxu0 0.0
    %1025 = vmatprep.subr.mxu0 0.0
    %1026 = vmatpush1.msra.mxu0 0.0
    %1027 = vmatprep.subr.mxu0 0.0
    %1028 = vmatpush1.msra.mxu0 0.0
    %1029 = vmatprep.subr.mxu0 0.0
    %1030 = vmatpush1.msra.mxu0 0.0
    %1031 = vmatprep.subr.mxu0 0.0
    %1032 = vmatpush1.msra.mxu0 0.0
    %1033 = vmatprep.subr.mxu0 0.0
    %1034 = vmatpush1.msra.mxu0 0.0
    %1035 = vmatprep.subr.mxu0 0.0
    %1036 = vmatpush1.msra.mxu0 0.0
    %1037 = vmatprep.subr.mxu0 0.0
    %1038 = vmatpush1.msra.mxu0 0.0
    %1039 = vmatprep.subr.mxu0 0.0
    %1040 = vmatpush1.msra.mxu0 0.0
    %1041 = vmatprep.subr.mxu0 0.0
    %1042 = vmatpush1.msra.mxu0 0.0
    %1043 = vmatprep.subr.mxu0 0.0
    %1044 = vmatpush1.msra.mxu0 0.0
    %1045 = vmatprep.subr.mxu0 0.0
    %1046 = vmatpush1.msra.mxu0 0.0
    %1047 = vmatprep.subr.mxu0 0.0
    %1048 = vmatpush1.msra.mxu0 0.0
    %1049 = vmatprep.subr.mxu0 0.0
    %1050 = vmatpush1.msra.mxu0 0.0
    %1051 = vmatprep.mubr.f32.mxu0 0.0
    %1052 = vmatmul.mubr.f32.gmra.mrb[0].mxu0 %v985
    %v1053 = vpop.f32.mrb[0].mxu0
    %v1054 = vadd.f32 0.0, %v1053
    %v1055 = vpop.f32.mrb[0].mxu0
    %1056 = vdwg.mxu0
    %v1058 = vsel %vm822, %v905, 0
    %1060 = vmatprep.subr.mxu0 0.0
    %1061 = vmatpush1.msra.mxu0 %v195
    %1062 = vmatprep.subr.mxu0 0.0
    %1063 = vmatpush1.msra.mxu0 0.0
    %1064 = vmatprep.subr.mxu0 0.0
    %1065 = vmatpush1.msra.mxu0 0.0
    %1066 = vmatprep.subr.mxu0 0.0
    %1067 = vmatpush1.msra.mxu0 0.0
    %1068 = vmatprep.subr.mxu0 0.0
    %1069 = vmatpush1.msra.mxu0 0.0
    %1070 = vmatprep.subr.mxu0 0.0
    %1071 = vmatpush1.msra.mxu0 0.0
    %1072 = vmatprep.subr.mxu0 0.0
    %1073 = vmatpush1.msra.mxu0 0.0
    %1074 = vmatprep.subr.mxu0 0.0
    %1075 = vmatpush1.msra.mxu0 0.0
    %1076 = vmatprep.subr.mxu0 0.0
    %1077 = vmatpush1.msra.mxu0 0.0
    %1078 = vmatprep.subr.mxu0 0.0
    %1079 = vmatpush1.msra.mxu0 0.0
    %1080 = vmatprep.subr.mxu0 0.0
    %1081 = vmatpush1.msra.mxu0 0.0
    %1082 = vmatprep.subr.mxu0 0.0
    %1083 = vmatpush1.msra.mxu0 0.0
    %1084 = vmatprep.subr.mxu0 0.0
    %1085 = vmatpush1.msra.mxu0 0.0
    %1086 = vmatprep.subr.mxu0 0.0
    %1087 = vmatpush1.msra.mxu0 0.0
    %1088 = vmatprep.subr.mxu0 0.0
    %1089 = vmatpush1.msra.mxu0 0.0
    %1090 = vmatprep.subr.mxu0 0.0
    %1091 = vmatpush1.msra.mxu0 0.0
    %1092 = vmatprep.subr.mxu0 0.0
    %1093 = vmatpush1.msra.mxu0 0.0
    %1094 = vmatprep.subr.mxu0 0.0
    %1095 = vmatpush1.msra.mxu0 0.0
    %1096 = vmatprep.subr.mxu0 0.0
    %1097 = vmatpush1.msra.mxu0 0.0
    %1098 = vmatprep.subr.mxu0 0.0
    %1099 = vmatpush1.msra.mxu0 0.0
    %1100 = vmatprep.subr.mxu0 0.0
    %1101 = vmatpush1.msra.mxu0 0.0
    %1102 = vmatprep.subr.mxu0 0.0
    %1103 = vmatpush1.msra.mxu0 0.0
    %1104 = vmatprep.subr.mxu0 0.0
    %1105 = vmatpush1.msra.mxu0 0.0
    %1106 = vmatprep.subr.mxu0 0.0
    %1107 = vmatpush1.msra.mxu0 0.0
    %1108 = vmatprep.subr.mxu0 0.0
    %1109 = vmatpush1.msra.mxu0 0.0
    %1110 = vmatprep.subr.mxu0 0.0
    %1111 = vmatpush1.msra.mxu0 0.0
    %1112 = vmatprep.subr.mxu0 0.0
    %1113 = vmatpush1.msra.mxu0 0.0
    %1114 = vmatprep.subr.mxu0 0.0
    %1115 = vmatpush1.msra.mxu0 0.0
    %1116 = vmatprep.subr.mxu0 0.0
    %1117 = vmatpush1.msra.mxu0 0.0
    %1118 = vmatprep.subr.mxu0 0.0
    %1119 = vmatpush1.msra.mxu0 0.0
    %1120 = vmatprep.subr.mxu0 0.0
    %1121 = vmatpush1.msra.mxu0 0.0
    %1122 = vmatprep.subr.mxu0 0.0
    %1123 = vmatpush1.msra.mxu0 0.0
    %1124 = vmatprep.mubr.f32.mxu0 0.0
    %1125 = vmatmul.mubr.f32.gmra.mrb[0].mxu0 %v1058
    %v1126 = vpop.f32.mrb[0].mxu0
    %v1127 = vadd.f32 0.0, %v1126
    %v1128 = vpop.f32.mrb[0].mxu0
    %1129 = vdwg.mxu0
    %v1131 = vsel %vm822, %v906, 0
    %1133 = vmatprep.subr.mxu0 0.0
    %1134 = vmatpush1.msra.mxu0 %v199
    %1135 = vmatprep.subr.mxu0 0.0
    %1136 = vmatpush1.msra.mxu0 0.0
    %1137 = vmatprep.subr.mxu0 0.0
    %1138 = vmatpush1.msra.mxu0 0.0
    %1139 = vmatprep.subr.mxu0 0.0
    %1140 = vmatpush1.msra.mxu0 0.0
    %1141 = vmatprep.subr.mxu0 0.0
    %1142 = vmatpush1.msra.mxu0 0.0
    %1143 = vmatprep.subr.mxu0 0.0
    %1144 = vmatpush1.msra.mxu0 0.0
    %1145 = vmatprep.subr.mxu0 0.0
    %1146 = vmatpush1.msra.mxu0 0.0
    %1147 = vmatprep.subr.mxu0 0.0
    %1148 = vmatpush1.msra.mxu0 0.0
    %1149 = vmatprep.subr.mxu0 0.0
    %1150 = vmatpush1.msra.mxu0 0.0
    %1151 = vmatprep.subr.mxu0 0.0
    %1152 = vmatpush1.msra.mxu0 0.0
    %1153 = vmatprep.subr.mxu0 0.0
    %1154 = vmatpush1.msra.mxu0 0.0
    %1155 = vmatprep.subr.mxu0 0.0
    %1156 = vmatpush1.msra.mxu0 0.0
    %1157 = vmatprep.subr.mxu0 0.0
    %1158 = vmatpush1.msra.mxu0 0.0
    %1159 = vmatprep.subr.mxu0 0.0
    %1160 = vmatpush1.msra.mxu0 0.0
    %1161 = vmatprep.subr.mxu0 0.0
    %1162 = vmatpush1.msra.mxu0 0.0
    %1163 = vmatprep.subr.mxu0 0.0
    %1164 = vmatpush1.msra.mxu0 0.0
    %1165 = vmatprep.subr.mxu0 0.0
    %1166 = vmatpush1.msra.mxu0 0.0
    %1167 = vmatprep.subr.mxu0 0.0
    %1168 = vmatpush1.msra.mxu0 0.0
    %1169 = vmatprep.subr.mxu0 0.0
    %1170 = vmatpush1.msra.mxu0 0.0
    %1171 = vmatprep.subr.mxu0 0.0
    %1172 = vmatpush1.msra.mxu0 0.0
    %1173 = vmatprep.subr.mxu0 0.0
    %1174 = vmatpush1.msra.mxu0 0.0
    %1175 = vmatprep.subr.mxu0 0.0
    %1176 = vmatpush1.msra.mxu0 0.0
    %1177 = vmatprep.subr.mxu0 0.0
    %1178 = vmatpush1.msra.mxu0 0.0
    %1179 = vmatprep.subr.mxu0 0.0
    %1180 = vmatpush1.msra.mxu0 0.0
    %1181 = vmatprep.subr.mxu0 0.0
    %1182 = vmatpush1.msra.mxu0 0.0
    %1183 = vmatprep.subr.mxu0 0.0
    %1184 = vmatpush1.msra.mxu0 0.0
    %1185 = vmatprep.subr.mxu0 0.0
    %1186 = vmatpush1.msra.mxu0 0.0
    %1187 = vmatprep.subr.mxu0 0.0
    %1188 = vmatpush1.msra.mxu0 0.0
    %1189 = vmatprep.subr.mxu0 0.0
    %1190 = vmatpush1.msra.mxu0 0.0
    %1191 = vmatprep.subr.mxu0 0.0
    %1192 = vmatpush1.msra.mxu0 0.0
    %1193 = vmatprep.subr.mxu0 0.0
    %1194 = vmatpush1.msra.mxu0 0.0
    %1195 = vmatprep.subr.mxu0 0.0
    %1196 = vmatpush1.msra.mxu0 0.0
    %1197 = vmatprep.mubr.f32.mxu0 0.0
    %1198 = vmatmul.mubr.f32.gmra.mrb[0].mxu0 %v1131
    %v1199 = vpop.f32.mrb[0].mxu0
    %v1200 = vadd.f32 0.0, %v1199
    %v1201 = vpop.f32.mrb[0].mxu0
    %1202 = vdwg.mxu0
    %v1204 = vsel %vm822, %v907, 0
    %1206 = vmatprep.subr.mxu0 0.0
    %1207 = vmatpush1.msra.mxu0 %v202
    %1208 = vmatprep.subr.mxu0 0.0
    %1209 = vmatpush1.msra.mxu0 0.0
    %1210 = vmatprep.subr.mxu0 0.0
    %1211 = vmatpush1.msra.mxu0 0.0
    %1212 = vmatprep.subr.mxu0 0.0
    %1213 = vmatpush1.msra.mxu0 0.0
    %1214 = vmatprep.subr.mxu0 0.0
    %1215 = vmatpush1.msra.mxu0 0.0
    %1216 = vmatprep.subr.mxu0 0.0
    %1217 = vmatpush1.msra.mxu0 0.0
    %1218 = vmatprep.subr.mxu0 0.0
    %1219 = vmatpush1.msra.mxu0 0.0
    %1220 = vmatprep.subr.mxu0 0.0
    %1221 = vmatpush1.msra.mxu0 0.0
    %1222 = vmatprep.subr.mxu0 0.0
    %1223 = vmatpush1.msra.mxu0 0.0
    %1224 = vmatprep.subr.mxu0 0.0
    %1225 = vmatpush1.msra.mxu0 0.0
    %1226 = vmatprep.subr.mxu0 0.0
    %1227 = vmatpush1.msra.mxu0 0.0
    %1228 = vmatprep.subr.mxu0 0.0
    %1229 = vmatpush1.msra.mxu0 0.0
    %1230 = vmatprep.subr.mxu0 0.0
    %1231 = vmatpush1.msra.mxu0 0.0
    %1232 = vmatprep.subr.mxu0 0.0
    %1233 = vmatpush1.msra.mxu0 0.0
    %1234 = vmatprep.subr.mxu0 0.0
    %1235 = vmatpush1.msra.mxu0 0.0
    %1236 = vmatprep.subr.mxu0 0.0
    %1237 = vmatpush1.msra.mxu0 0.0
    %1238 = vmatprep.subr.mxu0 0.0
    %1239 = vmatpush1.msra.mxu0 0.0
    %1240 = vmatprep.subr.mxu0 0.0
    %1241 = vmatpush1.msra.mxu0 0.0
    %1242 = vmatprep.subr.mxu0 0.0
    %1243 = vmatpush1.msra.mxu0 0.0
    %1244 = vmatprep.subr.mxu0 0.0
    %1245 = vmatpush1.msra.mxu0 0.0
    %1246 = vmatprep.subr.mxu0 0.0
    %1247 = vmatpush1.msra.mxu0 0.0
    %1248 = vmatprep.subr.mxu0 0.0
    %1249 = vmatpush1.msra.mxu0 0.0
    %1250 = vmatprep.subr.mxu0 0.0
    %1251 = vmatpush1.msra.mxu0 0.0
    %1252 = vmatprep.subr.mxu0 0.0
    %1253 = vmatpush1.msra.mxu0 0.0
    %1254 = vmatprep.subr.mxu0 0.0
    %1255 = vmatpush1.msra.mxu0 0.0
    %1256 = vmatprep.subr.mxu0 0.0
    %1257 = vmatpush1.msra.mxu0 0.0
    %1258 = vmatprep.subr.mxu0 0.0
    %1259 = vmatpush1.msra.mxu0 0.0
    %1260 = vmatprep.subr.mxu0 0.0
    %1261 = vmatpush1.msra.mxu0 0.0
    %1262 = vmatprep.subr.mxu0 0.0
    %1263 = vmatpush1.msra.mxu0 0.0
    %1264 = vmatprep.subr.mxu0 0.0
    %1265 = vmatpush1.msra.mxu0 0.0
    %1266 = vmatprep.subr.mxu0 0.0
    %1267 = vmatpush1.msra.mxu0 0.0
    %1268 = vmatprep.subr.mxu0 0.0
    %1269 = vmatpush1.msra.mxu0 0.0
    %1270 = vmatprep.mubr.f32.mxu0 0.0
    %1271 = vmatmul.mubr.f32.gmra.mrb[0].mxu0 %v1204
    %v1272 = vpop.f32.mrb[0].mxu0
    %v1273 = vadd.f32 0.0, %v1272
    %v1274 = vpop.f32.mrb[0].mxu0
    %1275 = vdwg.mxu0
    %v1277 = vsel %vm822, %v908, 0
    %1279 = vmatprep.subr.mxu0 0.0
    %1280 = vmatpush1.msra.mxu0 %v205
    %1281 = vmatprep.subr.mxu0 0.0
    %1282 = vmatpush1.msra.mxu0 0.0
    %1283 = vmatprep.subr.mxu0 0.0
    %1284 = vmatpush1.msra.mxu0 0.0
    %1285 = vmatprep.subr.mxu0 0.0
    %1286 = vmatpush1.msra.mxu0 0.0
    %1287 = vmatprep.subr.mxu0 0.0
    %1288 = vmatpush1.msra.mxu0 0.0
    %1289 = vmatprep.subr.mxu0 0.0
    %1290 = vmatpush1.msra.mxu0 0.0
    %1291 = vmatprep.subr.mxu0 0.0
    %1292 = vmatpush1.msra.mxu0 0.0
    %1293 = vmatprep.subr.mxu0 0.0
    %1294 = vmatpush1.msra.mxu0 0.0
    %1295 = vmatprep.subr.mxu0 0.0
    %1296 = vmatpush1.msra.mxu0 0.0
    %1297 = vmatprep.subr.mxu0 0.0
    %1298 = vmatpush1.msra.mxu0 0.0
    %1299 = vmatprep.subr.mxu0 0.0
    %1300 = vmatpush1.msra.mxu0 0.0
    %1301 = vmatprep.subr.mxu0 0.0
    %1302 = vmatpush1.msra.mxu0 0.0
    %1303 = vmatprep.subr.mxu0 0.0
    %1304 = vmatpush1.msra.mxu0 0.0
    %1305 = vmatprep.subr.mxu0 0.0
    %1306 = vmatpush1.msra.mxu0 0.0
    %1307 = vmatprep.subr.mxu0 0.0
    %1308 = vmatpush1.msra.mxu0 0.0
    %1309 = vmatprep.subr.mxu0 0.0
    %1310 = vmatpush1.msra.mxu0 0.0
    %1311 = vmatprep.subr.mxu0 0.0
    %1312 = vmatpush1.msra.mxu0 0.0
    %1313 = vmatprep.subr.mxu0 0.0
    %1314 = vmatpush1.msra.mxu0 0.0
    %1315 = vmatprep.subr.mxu0 0.0
    %1316 = vmatpush1.msra.mxu0 0.0
    %1317 = vmatprep.subr.mxu0 0.0
    %1318 = vmatpush1.msra.mxu0 0.0
    %1319 = vmatprep.subr.mxu0 0.0
    %1320 = vmatpush1.msra.mxu0 0.0
    %1321 = vmatprep.subr.mxu0 0.0
    %1322 = vmatpush1.msra.mxu0 0.0
    %1323 = vmatprep.subr.mxu0 0.0
    %1324 = vmatpush1.msra.mxu0 0.0
    %1325 = vmatprep.subr.mxu0 0.0
    %1326 = vmatpush1.msra.mxu0 0.0
    %1327 = vmatprep.subr.mxu0 0.0
    %1328 = vmatpush1.msra.mxu0 0.0
    %1329 = vmatprep.subr.mxu0 0.0
    %1330 = vmatpush1.msra.mxu0 0.0
    %1331 = vmatprep.subr.mxu0 0.0
    %1332 = vmatpush1.msra.mxu0 0.0
    %1333 = vmatprep.subr.mxu0 0.0
    %1334 = vmatpush1.msra.mxu0 0.0
    %1335 = vmatprep.subr.mxu0 0.0
    %1336 = vmatpush1.msra.mxu0 0.0
    %1337 = vmatprep.subr.mxu0 0.0
    %1338 = vmatpush1.msra.mxu0 0.0
    %1339 = vmatprep.subr.mxu0 0.0
    %1340 = vmatpush1.msra.mxu0 0.0
    %1341 = vmatprep.subr.mxu0 0.0
    %1342 = vmatpush1.msra.mxu0 0.0
    %1343 = vmatprep.mubr.f32.mxu0 0.0
    %1344 = vmatmul.mubr.f32.gmra.mrb[0].mxu0 %v1277
    %v1345 = vpop.f32.mrb[0].mxu0
    %v1346 = vadd.f32 0.0, %v1345
    %v1347 = vpop.f32.mrb[0].mxu0
    %1348 = vdwg.mxu0
    %v1350 = vsel %vm822, %v909, 0
    %1352 = vmatprep.subr.mxu0 0.0
    %1353 = vmatpush1.msra.mxu0 %v208
    %1354 = vmatprep.subr.mxu0 0.0
    %1355 = vmatpush1.msra.mxu0 0.0
    %1356 = vmatprep.subr.mxu0 0.0
    %1357 = vmatpush1.msra.mxu0 0.0
    %1358 = vmatprep.subr.mxu0 0.0
    %1359 = vmatpush1.msra.mxu0 0.0
    %1360 = vmatprep.subr.mxu0 0.0
    %1361 = vmatpush1.msra.mxu0 0.0
    %1362 = vmatprep.subr.mxu0 0.0
    %1363 = vmatpush1.msra.mxu0 0.0
    %1364 = vmatprep.subr.mxu0 0.0
    %1365 = vmatpush1.msra.mxu0 0.0
    %1366 = vmatprep.subr.mxu0 0.0
    %1367 = vmatpush1.msra.mxu0 0.0
    %1368 = vmatprep.subr.mxu0 0.0
    %1369 = vmatpush1.msra.mxu0 0.0
    %1370 = vmatprep.subr.mxu0 0.0
    %1371 = vmatpush1.msra.mxu0 0.0
    %1372 = vmatprep.subr.mxu0 0.0
    %1373 = vmatpush1.msra.mxu0 0.0
    %1374 = vmatprep.subr.mxu0 0.0
    %1375 = vmatpush1.msra.mxu0 0.0
    %1376 = vmatprep.subr.mxu0 0.0
    %1377 = vmatpush1.msra.mxu0 0.0
    %1378 = vmatprep.subr.mxu0 0.0
    %1379 = vmatpush1.msra.mxu0 0.0
    %1380 = vmatprep.subr.mxu0 0.0
    %1381 = vmatpush1.msra.mxu0 0.0
    %1382 = vmatprep.subr.mxu0 0.0
    %1383 = vmatpush1.msra.mxu0 0.0
    %1384 = vmatprep.subr.mxu0 0.0
    %1385 = vmatpush1.msra.mxu0 0.0
    %1386 = vmatprep.subr.mxu0 0.0
    %1387 = vmatpush1.msra.mxu0 0.0
    %1388 = vmatprep.subr.mxu0 0.0
    %1389 = vmatpush1.msra.mxu0 0.0
    %1390 = vmatprep.subr.mxu0 0.0
    %1391 = vmatpush1.msra.mxu0 0.0
    %1392 = vmatprep.subr.mxu0 0.0
    %1393 = vmatpush1.msra.mxu0 0.0
    %1394 = vmatprep.subr.mxu0 0.0
    %1395 = vmatpush1.msra.mxu0 0.0
    %1396 = vmatprep.subr.mxu0 0.0
    %1397 = vmatpush1.msra.mxu0 0.0
    %1398 = vmatprep.subr.mxu0 0.0
    %1399 = vmatpush1.msra.mxu0 0.0
    %1400 = vmatprep.subr.mxu0 0.0
    %1401 = vmatpush1.msra.mxu0 0.0
    %1402 = vmatprep.subr.mxu0 0.0
    %1403 = vmatpush1.msra.mxu0 0.0
    %1404 = vmatprep.subr.mxu0 0.0
    %1405 = vmatpush1.msra.mxu0 0.0
    %1406 = vmatprep.subr.mxu0 0.0
    %1407 = vmatpush1.msra.mxu0 0.0
    %1408 = vmatprep.subr.mxu0 0.0
    %1409 = vmatpush1.msra.mxu0 0.0
    %1410 = vmatprep.subr.mxu0 0.0
    %1411 = vmatpush1.msra.mxu0 0.0
    %1412 = vmatprep.subr.mxu0 0.0
    %1413 = vmatpush1.msra.mxu0 0.0
    %1414 = vmatprep.subr.mxu0 0.0
    %1415 = vmatpush1.msra.mxu0 0.0
    %1416 = vmatprep.mubr.f32.mxu0 0.0
    %1417 = vmatmul.mubr.f32.gmra.mrb[0].mxu0 %v1350
    %v1418 = vpop.f32.mrb[0].mxu0
    %v1419 = vadd.f32 0.0, %v1418
    %v1420 = vpop.f32.mrb[0].mxu0
    %1421 = vdwg.mxu0
    %v1423 = vsel %vm822, %v910, 0
    %1425 = vmatprep.subr.mxu0 0.0
    %1426 = vmatpush1.msra.mxu0 %v211
    %1427 = vmatprep.subr.mxu0 0.0
    %1428 = vmatpush1.msra.mxu0 0.0
    %1429 = vmatprep.subr.mxu0 0.0
    %1430 = vmatpush1.msra.mxu0 0.0
    %1431 = vmatprep.subr.mxu0 0.0
    %1432 = vmatpush1.msra.mxu0 0.0
    %1433 = vmatprep.subr.mxu0 0.0
    %1434 = vmatpush1.msra.mxu0 0.0
    %1435 = vmatprep.subr.mxu0 0.0
    %1436 = vmatpush1.msra.mxu0 0.0
    %1437 = vmatprep.subr.mxu0 0.0
    %1438 = vmatpush1.msra.mxu0 0.0
    %1439 = vmatprep.subr.mxu0 0.0
    %1440 = vmatpush1.msra.mxu0 0.0
    %1441 = vmatprep.subr.mxu0 0.0
    %1442 = vmatpush1.msra.mxu0 0.0
    %1443 = vmatprep.subr.mxu0 0.0
    %1444 = vmatpush1.msra.mxu0 0.0
    %1445 = vmatprep.subr.mxu0 0.0
    %1446 = vmatpush1.msra.mxu0 0.0
    %1447 = vmatprep.subr.mxu0 0.0
    %1448 = vmatpush1.msra.mxu0 0.0
    %1449 = vmatprep.subr.mxu0 0.0
    %1450 = vmatpush1.msra.mxu0 0.0
    %1451 = vmatprep.subr.mxu0 0.0
    %1452 = vmatpush1.msra.mxu0 0.0
    %1453 = vmatprep.subr.mxu0 0.0
    %1454 = vmatpush1.msra.mxu0 0.0
    %1455 = vmatprep.subr.mxu0 0.0
    %1456 = vmatpush1.msra.mxu0 0.0
    %1457 = vmatprep.subr.mxu0 0.0
    %1458 = vmatpush1.msra.mxu0 0.0
    %1459 = vmatprep.subr.mxu0 0.0
    %1460 = vmatpush1.msra.mxu0 0.0
    %1461 = vmatprep.subr.mxu0 0.0
    %1462 = vmatpush1.msra.mxu0 0.0
    %1463 = vmatprep.subr.mxu0 0.0
    %1464 = vmatpush1.msra.mxu0 0.0
    %1465 = vmatprep.subr.mxu0 0.0
    %1466 = vmatpush1.msra.mxu0 0.0
    %1467 = vmatprep.subr.mxu0 0.0
    %1468 = vmatpush1.msra.mxu0 0.0
    %1469 = vmatprep.subr.mxu0 0.0
    %1470 = vmatpush1.msra.mxu0 0.0
    %1471 = vmatprep.subr.mxu0 0.0
    %1472 = vmatpush1.msra.mxu0 0.0
    %1473 = vmatprep.subr.mxu0 0.0
    %1474 = vmatpush1.msra.mxu0 0.0
    %1475 = vmatprep.subr.mxu0 0.0
    %1476 = vmatpush1.msra.mxu0 0.0
    %1477 = vmatprep.subr.mxu0 0.0
    %1478 = vmatpush1.msra.mxu0 0.0
    %1479 = vmatprep.subr.mxu0 0.0
    %1480 = vmatpush1.msra.mxu0 0.0
    %1481 = vmatprep.subr.mxu0 0.0
    %1482 = vmatpush1.msra.mxu0 0.0
    %1483 = vmatprep.subr.mxu0 0.0
    %1484 = vmatpush1.msra.mxu0 0.0
    %1485 = vmatprep.subr.mxu0 0.0
    %1486 = vmatpush1.msra.mxu0 0.0
    %1487 = vmatprep.subr.mxu0 0.0
    %1488 = vmatpush1.msra.mxu0 0.0
    %1489 = vmatprep.mubr.f32.mxu0 0.0
    %1490 = vmatmul.mubr.f32.gmra.mrb[0].mxu0 %v1423
    %v1491 = vpop.f32.mrb[0].mxu0
    %v1492 = vadd.f32 0.0, %v1491
    %v1493 = vpop.f32.mrb[0].mxu0
    %1494 = vdwg.mxu0
    %1496 = vrot.lane.b32.xlu0 %v1127, 16
    %v1497 = vpop.permute.xlu0 %1496
    %1500 = vrot.lane.b32.xlu0 %v1273, 32
    %v1501 = vpop.permute.xlu0 %1500
    %1504 = vrot.lane.b32.xlu0 %v1419, 48
    %v1505 = vpop.permute.xlu0 %1504
    %v1507 = vsel %vm215, %v981, %v1497
    %v1508 = vsel %vm26, %v1507, %v1501
    %vm1509 = vcmask 392192
    %v1510 = vsel %vm1509, %v1508, %v1505
    %1512 = vrot.lane.b32.xlu0 %v1200, 16
    %v1513 = vpop.permute.xlu0 %1512
    %1516 = vrot.lane.b32.xlu0 %v1346, 32
    %v1517 = vpop.permute.xlu0 %1516
    %1520 = vrot.lane.b32.xlu0 %v1492, 48
    %v1521 = vpop.permute.xlu0 %1520
    %v1523 = vsel %vm215, %v1054, %v1513
    %v1524 = vsel %vm26, %v1523, %v1517
    %v1525 = vsel %vm1509, %v1524, %v1521
    %v1526 = vld [vmem:[%s2] sm:$0xff]
    %v1527 = vld [vmem:[%s2 + $0x8] sm:$0xff]
    %v1528 = vld [vmem:[%s2 + $0x10] sm:$0xff]
    %v1529 = vld [vmem:[%s2 + $0x18] sm:$0xff]
    %v1530 = vld [vmem:[%s2 + $0x20] sm:$0xff]
    %v1531 = vld [vmem:[%s2 + $0x28] sm:$0xff]
    %v1532 = vld [vmem:[%s2 + $0x30] sm:$0xff]
    %v1533 = vld [vmem:[%s2 + $0x38] sm:$0xff]
    %v1534 = vld [vmem:[%s3] sm:$0x1]
    %v1536 = vlaneseq
    %v1537 = vshrl.u32 %v1536, 7
    %v1538 = vsub.s32 0, %v1537
    %v1539 = vrot.slane %v1534, %v1538
    %vm1541 = vcmask 523264
    %v1543 = vsel %vm1541, %v1510, 0
    %v1546 = vsel %vm1541, %v1525, 0
    %1548 = vmatprep.subr.mxu0 0.0
    %1549 = vmatpush1.msra.mxu0 %v1526
    %1550 = vmatprep.subr.mxu0 0.0
    %1551 = vmatpush1.msra.mxu0 %v1527
    %1552 = vmatprep.subr.mxu0 0.0
    %1553 = vmatpush1.msra.mxu0 %v1528
    %1554 = vmatprep.subr.mxu0 0.0
    %1555 = vmatpush1.msra.mxu0 %v1529
    %1556 = vmatprep.subr.mxu0 0.0
    %1557 = vmatpush1.msra.mxu0 %v1530
    %1558 = vmatprep.subr.mxu0 0.0
    %1559 = vmatpush1.msra.mxu0 %v1531
    %1560 = vmatprep.subr.mxu0 0.0
    %1561 = vmatpush1.msra.mxu0 %v1532
    %1562 = vmatprep.subr.mxu0 0.0
    %1563 = vmatpush1.msra.mxu0 %v1533
    %1564 = vmatprep.subr.mxu0 0.0
    %1565 = vmatpush1.msra.mxu0 0.0
    %1566 = vmatprep.subr.mxu0 0.0
    %1567 = vmatpush1.msra.mxu0 0.0
    %1568 = vmatprep.subr.mxu0 0.0
    %1569 = vmatpush1.msra.mxu0 0.0
    %1570 = vmatprep.subr.mxu0 0.0
    %1571 = vmatpush1.msra.mxu0 0.0
    %1572 = vmatprep.subr.mxu0 0.0
    %1573 = vmatpush1.msra.mxu0 0.0
    %1574 = vmatprep.subr.mxu0 0.0
    %1575 = vmatpush1.msra.mxu0 0.0
    %1576 = vmatprep.subr.mxu0 0.0
    %1577 = vmatpush1.msra.mxu0 0.0
    %1578 = vmatprep.subr.mxu0 0.0
    %1579 = vmatpush1.msra.mxu0 0.0
    %1580 = vmatprep.subr.mxu0 0.0
    %1581 = vmatpush1.msra.mxu0 0.0
    %1582 = vmatprep.subr.mxu0 0.0
    %1583 = vmatpush1.msra.mxu0 0.0
    %1584 = vmatprep.subr.mxu0 0.0
    %1585 = vmatpush1.msra.mxu0 0.0
    %1586 = vmatprep.subr.mxu0 0.0
    %1587 = vmatpush1.msra.mxu0 0.0
    %1588 = vmatprep.subr.mxu0 0.0
    %1589 = vmatpush1.msra.mxu0 0.0
    %1590 = vmatprep.subr.mxu0 0.0
    %1591 = vmatpush1.msra.mxu0 0.0
    %1592 = vmatprep.subr.mxu0 0.0
    %1593 = vmatpush1.msra.mxu0 0.0
    %1594 = vmatprep.subr.mxu0 0.0
    %1595 = vmatpush1.msra.mxu0 0.0
    %1596 = vmatprep.subr.mxu0 0.0
    %1597 = vmatpush1.msra.mxu0 0.0
    %1598 = vmatprep.subr.mxu0 0.0
    %1599 = vmatpush1.msra.mxu0 0.0
    %1600 = vmatprep.subr.mxu0 0.0
    %1601 = vmatpush1.msra.mxu0 0.0
    %1602 = vmatprep.subr.mxu0 0.0
    %1603 = vmatpush1.msra.mxu0 0.0
    %1604 = vmatprep.subr.mxu0 0.0
    %1605 = vmatpush1.msra.mxu0 0.0
    %1606 = vmatprep.subr.mxu0 0.0
    %1607 = vmatpush1.msra.mxu0 0.0
    %1608 = vmatprep.subr.mxu0 0.0
    %1609 = vmatpush1.msra.mxu0 0.0
    %1610 = vmatprep.subr.mxu0 0.0
    %1611 = vmatpush1.msra.mxu0 0.0
    %1612 = vmatprep.mubr.f32.mxu0 0.0
    %1613 = vmatmul.mubr.f32.gmra.mrb[0].mxu0 %v1543
    %v1614 = vpop.f32.mrb[0].mxu0
    %v1615 = vadd.f32 %v1539, %v1614
    %v1616 = vpop.f32.mrb[0].mxu0
    %1617 = vmatprep.mubr.f32.mxu0 0.0
    %1618 = vmatmul.mubr.f32.gmra.mrb[0].mxu0 %v1546
    %v1619 = vpop.f32.mrb[0].mxu0
    %v1620 = vadd.f32 %v1539, %v1619
    %v1621 = vpop.f32.mrb[0].mxu0
    %1622 = vdwg.mxu0
    %v1625 = vrot.slane %v1620, 7
    %vm1626 = vcmask 1041409
    %v1627 = vsel %vm1626, %v1625, %v1615
    %v1629 = vrot.slane %v1615, 1
    %v1630 = vsel %vm1626, %v1620, %v1629
    %1631 = vrot.lane.b32.xlu0 %v1630, 32
    %v1632 = vpop.permute.xlu0 %1631
    %v1634 = vrot.slane %v1615, 2
    %v1635 = vrot.slane %v1620, 1
    %v1636 = vsel %vm1626, %v1635, %v1634
    %1637 = vrot.lane.b32.xlu0 %v1636, 64
    %v1638 = vpop.permute.xlu0 %1637
    %v1640 = vrot.slane %v1615, 3
    %v1641 = vrot.slane %v1620, 2
    %v1642 = vsel %vm1626, %v1641, %v1640
    %1643 = vrot.lane.b32.xlu0 %v1642, 96
    %v1644 = vpop.permute.xlu0 %1643
    %v1646 = vrot.slane %v1615, 4
    %v1647 = vrot.slane %v1620, 3
    %v1648 = vsel %vm1626, %v1647, %v1646
    %v1650 = vrot.slane %v1615, 5
    %v1651 = vrot.slane %v1620, 4
    %v1652 = vsel %vm1626, %v1651, %v1650
    %1653 = vrot.lane.b32.xlu0 %v1652, 32
    %v1654 = vpop.permute.xlu0 %1653
    %v1656 = vrot.slane %v1615, 6
    %v1657 = vrot.slane %v1620, 5
    %v1658 = vsel %vm1626, %v1657, %v1656
    %1659 = vrot.lane.b32.xlu0 %v1658, 64
    %v1660 = vpop.permute.xlu0 %1659
    %v1662 = vrot.slane %v1615, 7
    %v1663 = vrot.slane %v1620, 6
    %v1664 = vsel %vm1626, %v1663, %v1662
    %1665 = vrot.lane.b32.xlu0 %v1664, 96
    %v1666 = vpop.permute.xlu0 %1665
    %v1668 = vsel %vm26, %v1627, %v1632
    %v1669 = vsel %vm1541, %v1668, %v1638
    %vm1670 = vcmask 785408
    %v1671 = vsel %vm1670, %v1669, %v1644
    %v1672 = vsel %vm26, %v1648, %v1654
    %v1673 = vsel %vm1541, %v1672, %v1660
    %v1674 = vsel %vm1670, %v1673, %v1666
    %v1677 = vcombine.low %v1671, %v1674
    %v1679 = vunpack.c.l.s4 1983009808
    %v1680 = vunpack.c.0.s8 %v1679
    %v1681 = vlaneseq
    %v1682 = vshrl.u32 %v1681, 7
    %v1683 = vsub.s32 %v1680, %v1682
    %v1684 = vrot.slane %v1677, %v1683
    %1686 = vst [vmem:[#allocation2] sm:$0xf] %v1684
    // Predicated region
    $region26: #{tpu_custom_call.1} parent=1 // pred_check
      _
    $region27: #{tpu_custom_call.1} parent=1 // pred_check_branch
      %1688 = sbr.rel (0) target = $region29
    $region28: #{tpu_custom_call.1} parent=1 // pred_region
      %s1690 = ssub.s32 64, 64
      %1691 = vsyncadd [#allocation3], %s1690
      %s1693 = sshll.u32 [#allocation2], 4
      %s1694 = int_to_ptr.vmem [resolvable:$true] %s1693
      %1696 = dma.vmem_to_hbm [thread:$0]  %s1694, 64, %s6, [#allocation3]
    $region29: #{tpu_custom_call.1} parent=1 // pred_fallthru
      _
    // Predicated region
    $region30: #{tpu_custom_call.1} parent=1 // pred_check
      _
    $region31: #{tpu_custom_call.1} parent=1 // pred_check_branch
      %1698 = sbr.rel (0) target = $region33
    $region32: #{tpu_custom_call.1} parent=1 // pred_region
      %1699 = dma.done [#allocation3], 64
    $region33: #{tpu_custom_call.1} parent=1 // pred_fallthru
      _
    %1700 = vsyncpa [#allocation3], 1

</llo_original>
